<compile_context>
chip_gen: v5e
topology: v5e:2x2
jax: 0.10.0
libtpu: 0.0.40
codegen_flags: <defaults>
</compile_context>

<pallas_src>
import functools
import math

import jax
import jax.numpy as jnp
from jax.experimental import pallas as pl
from jax.experimental.pallas import tpu as pltpu

EPS = 1e-5          # nn.BatchNorm2d default
KH = KW = 5
SH, SW = 2, 1       # stride
PH, PW = 2, 2       # padding


def _conv_stats_kernel(strip_ref, wj_ref, shift_ref, bcol_ref,
                       acc_ref, sum_ref, sq_ref, *, c_out, w_out, wl, tn):
    """Pass 1: fused 5x5 conv + 1x1 shortcut (single MXU tile) + per-image BN partial sums.

    strip_ref : (KH*C_in, TN) bf16   H-unfolded input strip for this (image, row-block);
                                     row = i*C_in + ci, lane = t*WL + w (padded W coord).
    wj_ref    : (KW, 2*C_out, KH*C_in) bf16  per-W-tap weights; rows [C_out:) of tap j=PW
                                     carry the 1x1 shortcut (it reads the same samples).
    shift_ref : (KW-1, TN, TN) bf16  0/1 matrices, shift_ref[j-1][p, l] = 1 iff p == l + j,
                                     so  s @ shift_ref[j-1]  is the exact "lane l reads
                                     lane l+j" shift, executed on the MXU (VPU/vst idle).
    bcol_ref  : (2*C_out, 1) f32     [0 ; shortcut bias].
    acc_ref   : (2*C_out, TN) f32    out: pre-BN conv (top) and shortcut+bias (bottom).
    sum_ref   : (C_out, 1)  f32      out: per-image sum of the pre-BN conv (valid lanes).
    sq_ref    : (C_out, 1)  f32      out: per-image sum of squares.
    """
    s0 = strip_ref[...]                                            # (K, TN) bf16
    acc = jnp.dot(wj_ref[0], s0, preferred_element_type=jnp.float32)
    for j in range(1, KW):                                         # unrolled, KW-1 = 4
        # Exact lane shift on the MXU: sj[r, l] = s0[r, l + j] (0 past the tile end).
        sj = jnp.dot(s0, shift_ref[j - 1],
                     preferred_element_type=jnp.float32).astype(jnp.bfloat16)
        acc += jnp.dot(wj_ref[j], sj, preferred_element_type=jnp.float32)

    y = acc[:c_out, :]                      # main conv (its bias is cancelled by train-BN)
    acc_ref[...] = acc + bcol_ref[...]      # shortcut bias lands on the bottom half only

    # BN batch statistics over valid lanes only (lane % WL < W_out masks the W apron;
    # zero-padded extra output rows contribute exactly 0 because their strip rows are 0).
    lane = jax.lax.broadcasted_iota(jnp.int32, (1, tn), 1)
    ym = jnp.where((lane % wl) < w_out, y, 0.0)

    @pl.when(pl.program_id(1) == 0)
    def _():
        sum_ref[...] = jnp.zeros_like(sum_ref)
        sq_ref[...] = jnp.zeros_like(sq_ref)

    sum_ref[...] += jnp.sum(ym, axis=1, keepdims=True)
    sq_ref[...] += jnp.sum(ym * ym, axis=1, keepdims=True)


def _bn_relu_add_kernel(acc_ref, scale_ref, offset_ref, o_ref, *, c_out):
    """Pass 2: pure elementwise folded-BN FMA + ReLU + shortcut add (no conv recompute)."""
    a = acc_ref[...]
    y = a[:c_out, :]
    s = a[c_out:, :]
    o_ref[...] = jnp.maximum(y * scale_ref[...] + offset_ref[...], 0.0) + s


@jax.jit
def conv_block_forward(x, w, b, ws, bs, gamma, beta):
    """x: (N, C_in, H, W) f32.  Returns (N, C_out, H_out, W_out) f32 (train-mode BN)."""
    del b  # exactly cancelled by train-mode BN mean subtraction
    n, c_in, h, wd = x.shape
    c_out = w.shape[0]
    h_out = (h + 2 * PH - KH) // SH + 1
    w_out = (wd + 2 * PW - KW) // SW + 1
    # 1x1 stride-(2,1) shortcut must land on the same output grid as the main conv.
    assert (h - 1) // SH + 1 == h_out and (wd - 1) // SW + 1 == w_out

    # ---- tile geometry: TH output rows x WL lanes per row-block; TN = TH*WL is always an
    #      exact multiple of 128 (unmasked output stores), targeted at 256-512 lanes.
    wp = wd + 2 * PW                                   # padded width (>= W_out + KW - 1)
    wl = -(-wp // 32) * 32                             # per-output-row lane width
    t_align = 128 // math.gcd(wl, 128)                 # TH granularity keeping TN % 128 == 0
    th = t_align
    while th * wl < 256 and th < h_out:
        th += t_align
    h_out_pad = -(-h_out // th) * th
    num_hb = h_out_pad // th
    tn = th * wl
    k = KH * c_in

    # ---- wrapper-side layout glue (pure XLA; input read once as bf16, ~KH/SH = 2.5x strip)
    h_rows = SH * (h_out_pad - 1) + KH
    xpad = jnp.pad(x, ((0, 0), (0, 0), (PH, h_rows - h - PH), (PW, wl - wd - PW)))
    rows = SH * jnp.arange(h_out_pad)[None, :] + jnp.arange(KH)[:, None]    # (KH, Ho_pad)
    strip = xpad[:, :, rows, :]                                # (N, C_in, KH, Ho_pad, WL)
    strip = jnp.transpose(strip, (0, 3, 2, 1, 4))              # (N, Ho_pad, KH, C_in, WL)
    strip = strip.reshape(n, num_hb, th, KH, c_in, wl)
    strip = jnp.transpose(strip, (0, 1, 3, 4, 2, 5))           # (N, HB, KH, C_in, TH, WL)
    strip = strip.reshape(n, num_hb, k, tn).astype(jnp.bfloat16)

    # ---- per-tap weights (KW, 2*C_out, KH*C_in): main conv on top; the 1x1 shortcut is
    #      fused into tap (i=PH, j=PW), which reads exactly x[.., SH*ho, wo].
    wm = jnp.transpose(w, (3, 0, 2, 1)).reshape(KW, c_out, k)     # [j, co, i*C_in + ci]
    wj = jnp.zeros((KW, 2 * c_out, k), jnp.float32)
    wj = wj.at[:, :c_out, :].set(wm)
    wj = wj.at[PW, c_out:, PH * c_in:(PH + 1) * c_in].set(ws[:, :, 0, 0])
    wj = wj.astype(jnp.bfloat16)
    bcol = jnp.concatenate([jnp.zeros((c_out,), jnp.float32), bs]).reshape(2 * c_out, 1)

    # 0/1 lane-shift matrices: shift[j-1][p, l] == 1 iff p == l + j  (exact in bf16).
    idx = jnp.arange(tn)
    shift = jnp.stack([(idx[:, None] == idx[None, :] + j).astype(jnp.bfloat16)
                       for j in range(1, KW)])

    kw_static = dict(c_out=c_out, w_out=w_out, wl=wl, tn=tn)

    # ---- pass 1: conv + shortcut + per-image BN partial sums --------------------------
    acc, ssum, ssq = pl.pallas_call(
        functools.partial(_conv_stats_kernel, **kw_static),
        out_shape=(jax.ShapeDtypeStruct((n, num_hb, 2 * c_out, tn), jnp.float32),
                   jax.ShapeDtypeStruct((n, c_out, 1), jnp.float32),
                   jax.ShapeDtypeStruct((n, c_out, 1), jnp.float32)),
        grid=(n, num_hb),
        in_specs=[pl.BlockSpec((None, None, k, tn), lambda i, j: (i, j, 0, 0)),
                  pl.BlockSpec((KW, 2 * c_out, k), lambda i, j: (0, 0, 0)),
                  pl.BlockSpec((KW - 1, tn, tn), lambda i, j: (0, 0, 0)),
                  pl.BlockSpec((2 * c_out, 1), lambda i, j: (0, 0))],
        out_specs=(pl.BlockSpec((None, None, 2 * c_out, tn), lambda i, j: (i, j, 0, 0)),
                   pl.BlockSpec((None, c_out, 1), lambda i, j: (i, 0, 0)),
                   pl.BlockSpec((None, c_out, 1), lambda i, j: (i, 0, 0))),
        compiler_params=pltpu.CompilerParams(
            dimension_semantics=("parallel", "arbitrary")),
    )(strip, wj, shift, bcol)

    # ---- fold BN (train mode, biased variance) into one per-channel FMA ----------------
    cnt = n * h_out * w_out
    mean = jnp.sum(ssum, axis=0)[:, 0] / cnt
    var = jnp.maximum(jnp.sum(ssq, axis=0)[:, 0] / cnt - mean * mean, 0.0)  # clamp guard
    scale = gamma * jax.lax.rsqrt(var + EPS)
    offset = beta - mean * scale
    # TODO(synk): BatchNorm running_mean/running_var buffer updates (a training-time side
    # effect of the PyTorch module) are not modelled; the returned tensor does not use them.

    # ---- pass 2: pure elementwise scale*y+offset -> ReLU -> + shortcut ------------------
    out = pl.pallas_call(
        functools.partial(_bn_relu_add_kernel, c_out=c_out),
        out_shape=jax.ShapeDtypeStruct((n, num_hb, c_out, tn), jnp.float32),
        grid=(n, num_hb),
        in_specs=[pl.BlockSpec((None, None, 2 * c_out, tn), lambda i, j: (i, j, 0, 0)),
                  pl.BlockSpec((c_out, 1), lambda i, j: (0, 0)),
                  pl.BlockSpec((c_out, 1), lambda i, j: (0, 0))],
        out_specs=pl.BlockSpec((None, None, c_out, tn), lambda i, j: (i, j, 0, 0)),
        compiler_params=pltpu.CompilerParams(
            dimension_semantics=("parallel", "parallel")),   # v7x megacore; no-op v5e/v6e
    )(acc, scale.reshape(c_out, 1), offset.reshape(c_out, 1))

    # Lane layout (.., C_out, TH*WL) -> NCHW (pure layout glue; drops apron lanes / pad rows).
    out = out.reshape(n, num_hb, c_out, th, wl)[..., :w_out]
    out = jnp.transpose(out, (0, 2, 1, 3, 4)).reshape(n, c_out, h_out_pad, w_out)
    return out[:, :, :h_out, :]


def reference_forward(x, w, b, ws, bs, gamma, beta):
    """Pure-JAX reference mirroring the PyTorch module (BN in training mode)."""
    dn = jax.lax.conv_dimension_numbers(x.shape, w.shape, ("NCHW", "OIHW", "NCHW"))
    y = jax.lax.conv_general_dilated(x, w, (SH, SW), ((PH, PH), (PW, PW)),
                                     dimension_numbers=dn,
                                     precision=jax.lax.Precision.HIGHEST)
    y = y + b[None, :, None, None]
    mean = y.mean(axis=(0, 2, 3), keepdims=True)
    var = ((y - mean) ** 2).mean(axis=(0, 2, 3), keepdims=True)
    y = (y - mean) / jnp.sqrt(var + EPS)
    y = y * gamma[None, :, None, None] + beta[None, :, None, None]
    r = jnp.maximum(y, 0.0)
    dn2 = jax.lax.conv_dimension_numbers(x.shape, ws.shape, ("NCHW", "OIHW", "NCHW"))
    s = jax.lax.conv_general_dilated(x, ws, (SH, SW), ((0, 0), (0, 0)),
                                     dimension_numbers=dn2,
                                     precision=jax.lax.Precision.HIGHEST)
    s = s + bs[None, :, None, None]
    return r + s


if __name__ == "__main__":
    key = jax.random.PRNGKey(0)
    k_x, k_w, k_b, k_ws, k_bs, k_g, k_be = jax.random.split(key, 7)

    N, C_IN, C_OUT, H, W = 2, 4, 8, 16, 16

    x = jax.random.normal(k_x, (N, C_IN, H, W), dtype=jnp.float32)
    w = 0.1 * jax.random.normal(k_w, (C_OUT, C_IN, 5, 5), dtype=jnp.float32)
    b = 0.1 * jax.random.normal(k_b, (C_OUT,), dtype=jnp.float32)
    ws = 0.1 * jax.random.normal(k_ws, (C_OUT, C_IN, 1, 1), dtype=jnp.float32)
    bs = 0.1 * jax.random.normal(k_bs, (C_OUT,), dtype=jnp.float32)
    gamma = 1.0 + 0.1 * jax.random.normal(k_g, (C_OUT,), dtype=jnp.float32)
    beta = 0.1 * jax.random.normal(k_be, (C_OUT,), dtype=jnp.float32)

    out = jax.block_until_ready(conv_block_forward(x, w, b, ws, bs, gamma, beta))
    assert out.shape == (N, C_OUT, H // 2, W), out.shape

    # Tight check: reference fed the same bf16-rounded conv operands the kernel uses
    # (biases / BN affine stay f32 in the kernel, so they are not quantized here).
    q = lambda a: a.astype(jnp.bfloat16).astype(jnp.float32)
    ref_q = jax.block_until_ready(reference_forward(q(x), q(w), b, q(ws), bs, gamma, beta))
    err_q = float(jnp.max(jnp.abs(out - ref_q)))
    assert jnp.allclose(out, ref_q, rtol=3e-3, atol=3e-3), err_q

    # Loose check against the full-f32 PyTorch-equivalent reference (bf16 operand rounding).
    ref = jax.block_until_ready(reference_forward(x, w, b, ws, bs, gamma, beta))
    err = float(jnp.max(jnp.abs(out - ref)))
    assert jnp.allclose(out, ref, rtol=1e-1, atol=1e-1), err

    print("KERNEL_OK")
</pallas_src>

<mosaic_0001>
module attributes {stable_mosaic.version = 11 : i64} {
  func.func @_bn_relu_add_kernel(%arg0: i32, %arg1: i32, %arg2: memref<1x1x16x256xf32, #tpu.memory_space<vmem>>, %arg3: memref<8x1xf32, #tpu.memory_space<vmem>>, %arg4: memref<8x1xf32, #tpu.memory_space<vmem>>, %arg5: memref<1x1x8x256xf32, #tpu.memory_space<vmem>>) attributes {dimension_semantics = [#tpu.dimension_semantics<parallel>, #tpu.dimension_semantics<parallel>], iteration_bounds = array<i64: 2, 1>, scalar_prefetch = 0 : i64, scratch_operands = 0 : i64, tpu.core_type = #tpu.core_type<tc>, window_params = [{transform_indices = @transform_0, window_bounds = array<i64: 1, 1, 16, 256>}, {pipeline_mode = #tpu.pipeline_mode<synchronous>, transform_indices = @transform_1, window_bounds = array<i64: 8, 1>}, {pipeline_mode = #tpu.pipeline_mode<synchronous>, transform_indices = @transform_2, window_bounds = array<i64: 8, 1>}, {transform_indices = @transform_3, window_bounds = array<i64: 1, 1, 8, 256>}]} {
    %c0 = arith.constant 0 : index
    %c0_0 = arith.constant 0 : index
    %c0_1 = arith.constant 0 : index
    %c0_2 = arith.constant 0 : index
    %0 = vector.load %arg2[%c0, %c0_0, %c0_1, %c0_2] : memref<1x1x16x256xf32, #tpu.memory_space<vmem>>, vector<1x1x16x256xf32>
    %1 = vector.shape_cast %0 : vector<1x1x16x256xf32> to vector<16x256xf32>
    %2 = vector.extract_strided_slice %1 {offsets = [0, 0], sizes = [8, 256], strides = [1, 1]} : vector<16x256xf32> to vector<8x256xf32>
    %3 = vector.extract_strided_slice %1 {offsets = [8, 0], sizes = [8, 256], strides = [1, 1]} : vector<16x256xf32> to vector<8x256xf32>
    %c0_3 = arith.constant 0 : index
    %c0_4 = arith.constant 0 : index
    %4 = vector.load %arg3[%c0_3, %c0_4] : memref<8x1xf32, #tpu.memory_space<vmem>>, vector<8x1xf32>
    %5 = vector.broadcast %4 : vector<8x1xf32> to vector<8x256xf32>
    %6 = arith.mulf %2, %5 : vector<8x256xf32>
    %c0_5 = arith.constant 0 : index
    %c0_6 = arith.constant 0 : index
    %7 = vector.load %arg4[%c0_5, %c0_6] : memref<8x1xf32, #tpu.memory_space<vmem>>, vector<8x1xf32>
    %8 = vector.broadcast %7 : vector<8x1xf32> to vector<8x256xf32>
    %9 = arith.addf %6, %8 : vector<8x256xf32>
    %cst = arith.constant 0.000000e+00 : f32
    %10 = vector.broadcast %cst : f32 to vector<8x256xf32>
    %11 = arith.maximumf %9, %10 : vector<8x256xf32>
    %12 = arith.addf %11, %3 : vector<8x256xf32>
    %c0_7 = arith.constant 0 : index
    %c0_8 = arith.constant 0 : index
    %c0_9 = arith.constant 0 : index
    %c0_10 = arith.constant 0 : index
    %13 = vector.load %arg5[%c0_7, %c0_8, %c0_9, %c0_10] : memref<1x1x8x256xf32, #tpu.memory_space<vmem>>, vector<1x1x8x256xf32>
    %14 = vector.shape_cast %13 : vector<1x1x8x256xf32> to vector<8x256xf32>
    %15 = vector.shape_cast %12 : vector<8x256xf32> to vector<1x1x8x256xf32>
    tpu.vector_store %arg5[%c0_7, %c0_8, %c0_9, %c0_10], %15 {strides = array<i32>} : memref<1x1x8x256xf32, #tpu.memory_space<vmem>>, vector<1x1x8x256xf32>,
    return
  }
  func.func @transform_0(%arg0: i32, %arg1: i32) -> (i32, i32, i32, i32) {
    %c0_i32 = arith.constant 0 : i32
    %c0_i32_0 = arith.constant 0 : i32
    %c0_i32_1 = arith.constant 0 : i32
    return %arg0, %arg1, %c0_i32, %c0_i32_0 : i32, i32, i32, i32
  }
  func.func @transform_1(%arg0: i32, %arg1: i32) -> (i32, i32) {
    %c0_i32 = arith.constant 0 : i32
    %c0_i32_0 = arith.constant 0 : i32
    %c0_i32_1 = arith.constant 0 : i32
    return %c0_i32, %c0_i32_0 : i32, i32
  }
  func.func @transform_2(%arg0: i32, %arg1: i32) -> (i32, i32) {
    %c0_i32 = arith.constant 0 : i32
    %c0_i32_0 = arith.constant 0 : i32
    %c0_i32_1 = arith.constant 0 : i32
    return %c0_i32, %c0_i32_0 : i32, i32
  }
  func.func @transform_3(%arg0: i32, %arg1: i32) -> (i32, i32, i32, i32) {
    %c0_i32 = arith.constant 0 : i32
    %c0_i32_0 = arith.constant 0 : i32
    %c0_i32_1 = arith.constant 0 : i32
    return %arg0, %arg1, %c0_i32, %c0_i32_0 : i32, i32, i32, i32
  }
}

module attributes {stable_mosaic.version = 11 : i64} {
  func.func @_conv_stats_kernel(%arg0: i32, %arg1: i32, %arg2: memref<1x1x20x256xbf16, #tpu.memory_space<vmem>>, %arg3: memref<5x16x20xbf16, #tpu.memory_space<vmem>>, %arg4: memref<4x256x256xbf16, #tpu.memory_space<vmem>>, %arg5: memref<16x1xf32, #tpu.memory_space<vmem>>, %arg6: memref<1x1x16x256xf32, #tpu.memory_space<vmem>>, %arg7: memref<1x8x1xf32, #tpu.memory_space<vmem>>, %arg8: memref<1x8x1xf32, #tpu.memory_space<vmem>>) attributes {dimension_semantics = [#tpu.dimension_semantics<parallel>, #tpu.dimension_semantics<arbitrary>], iteration_bounds = array<i64: 2, 1>, scalar_prefetch = 0 : i64, scratch_operands = 0 : i64, tpu.core_type = #tpu.core_type<tc>, window_params = [{transform_indices = @transform_0, window_bounds = array<i64: 1, 1, 20, 256>}, {pipeline_mode = #tpu.pipeline_mode<synchronous>, transform_indices = @transform_1, window_bounds = array<i64: 5, 16, 20>}, {pipeline_mode = #tpu.pipeline_mode<synchronous>, transform_indices = @transform_2, window_bounds = array<i64: 4, 256, 256>}, {pipeline_mode = #tpu.pipeline_mode<synchronous>, transform_indices = @transform_3, window_bounds = array<i64: 16, 1>}, {transform_indices = @transform_4, window_bounds = array<i64: 1, 1, 16, 256>}, {transform_indices = @transform_5, window_bounds = array<i64: 1, 8, 1>}, {transform_indices = @transform_6, window_bounds = array<i64: 1, 8, 1>}]} {
    %c0 = arith.constant 0 : index
    %c0_0 = arith.constant 0 : index
    %c0_1 = arith.constant 0 : index
    %c0_2 = arith.constant 0 : index
    %0 = vector.load %arg2[%c0, %c0_0, %c0_1, %c0_2] : memref<1x1x20x256xbf16, #tpu.memory_space<vmem>>, vector<1x1x20x256xbf16>
    %1 = vector.shape_cast %0 : vector<1x1x20x256xbf16> to vector<20x256xbf16>
    %c0_3 = arith.constant 0 : index
    %c0_4 = arith.constant 0 : index
    %c0_5 = arith.constant 0 : index
    %2 = vector.load %arg3[%c0_3, %c0_4, %c0_5] : memref<5x16x20xbf16, #tpu.memory_space<vmem>>, vector<1x16x20xbf16>
    %3 = vector.shape_cast %2 : vector<1x16x20xbf16> to vector<16x20xbf16>
    %cst = arith.constant dense<0.000000e+00> : vector<16x256xf32>
    %4 = tpu.matmul %3, %1, %cst {dimension_numbers = #tpu.dot_dimension_numbers<[1], [0], [0], [1], [0, 0, 1, 1], [], []>} : vector<16x20xbf16>, vector<20x256xbf16>, vector<16x256xf32> -> vector<16x256xf32>
    %c0_6 = arith.constant 0 : index
    %c0_7 = arith.constant 0 : index
    %c0_8 = arith.constant 0 : index
    %5 = vector.load %arg4[%c0_6, %c0_7, %c0_8] : memref<4x256x256xbf16, #tpu.memory_space<vmem>>, vector<1x256x256xbf16>
    %6 = vector.shape_cast %5 : vector<1x256x256xbf16> to vector<256x256xbf16>
    %cst_9 = arith.constant dense<0.000000e+00> : vector<20x256xf32>
    %7 = tpu.matmul %1, %6, %cst_9 {dimension_numbers = #tpu.dot_dimension_numbers<[1], [0], [0], [1], [0, 0, 1, 1], [], []>} : vector<20x256xbf16>, vector<256x256xbf16>, vector<20x256xf32> -> vector<20x256xf32>
    %8 = arith.truncf %7 : vector<20x256xf32> to vector<20x256xbf16>
    %c1 = arith.constant 1 : index
    %c0_10 = arith.constant 0 : index
    %c0_11 = arith.constant 0 : index
    %9 = vector.load %arg3[%c1, %c0_10, %c0_11] : memref<5x16x20xbf16, #tpu.memory_space<vmem>>, vector<1x16x20xbf16>
    %10 = vector.shape_cast %9 : vector<1x16x20xbf16> to vector<16x20xbf16>
    %cst_12 = arith.constant dense<0.000000e+00> : vector<16x256xf32>
    %11 = tpu.matmul %10, %8, %cst_12 {dimension_numbers = #tpu.dot_dimension_numbers<[1], [0], [0], [1], [0, 0, 1, 1], [], []>} : vector<16x20xbf16>, vector<20x256xbf16>, vector<16x256xf32> -> vector<16x256xf32>
    %12 = arith.addf %4, %11 : vector<16x256xf32>
    %c1_13 = arith.constant 1 : index
    %c0_14 = arith.constant 0 : index
    %c0_15 = arith.constant 0 : index
    %13 = vector.load %arg4[%c1_13, %c0_14, %c0_15] : memref<4x256x256xbf16, #tpu.memory_space<vmem>>, vector<1x256x256xbf16>
    %14 = vector.shape_cast %13 : vector<1x256x256xbf16> to vector<256x256xbf16>
    %cst_16 = arith.constant dense<0.000000e+00> : vector<20x256xf32>
    %15 = tpu.matmul %1, %14, %cst_16 {dimension_numbers = #tpu.dot_dimension_numbers<[1], [0], [0], [1], [0, 0, 1, 1], [], []>} : vector<20x256xbf16>, vector<256x256xbf16>, vector<20x256xf32> -> vector<20x256xf32>
    %16 = arith.truncf %15 : vector<20x256xf32> to vector<20x256xbf16>
    %c2 = arith.constant 2 : index
    %c0_17 = arith.constant 0 : index
    %c0_18 = arith.constant 0 : index
    %17 = vector.load %arg3[%c2, %c0_17, %c0_18] : memref<5x16x20xbf16, #tpu.memory_space<vmem>>, vector<1x16x20xbf16>
    %18 = vector.shape_cast %17 : vector<1x16x20xbf16> to vector<16x20xbf16>
    %cst_19 = arith.constant dense<0.000000e+00> : vector<16x256xf32>
    %19 = tpu.matmul %18, %16, %cst_19 {dimension_numbers = #tpu.dot_dimension_numbers<[1], [0], [0], [1], [0, 0, 1, 1], [], []>} : vector<16x20xbf16>, vector<20x256xbf16>, vector<16x256xf32> -> vector<16x256xf32>
    %20 = arith.addf %12, %19 : vector<16x256xf32>
    %c2_20 = arith.constant 2 : index
    %c0_21 = arith.constant 0 : index
    %c0_22 = arith.constant 0 : index
    %21 = vector.load %arg4[%c2_20, %c0_21, %c0_22] : memref<4x256x256xbf16, #tpu.memory_space<vmem>>, vector<1x256x256xbf16>
    %22 = vector.shape_cast %21 : vector<1x256x256xbf16> to vector<256x256xbf16>
    %cst_23 = arith.constant dense<0.000000e+00> : vector<20x256xf32>
    %23 = tpu.matmul %1, %22, %cst_23 {dimension_numbers = #tpu.dot_dimension_numbers<[1], [0], [0], [1], [0, 0, 1, 1], [], []>} : vector<20x256xbf16>, vector<256x256xbf16>, vector<20x256xf32> -> vector<20x256xf32>
    %24 = arith.truncf %23 : vector<20x256xf32> to vector<20x256xbf16>
    %c3 = arith.constant 3 : index
    %c0_24 = arith.constant 0 : index
    %c0_25 = arith.constant 0 : index
    %25 = vector.load %arg3[%c3, %c0_24, %c0_25] : memref<5x16x20xbf16, #tpu.memory_space<vmem>>, vector<1x16x20xbf16>
    %26 = vector.shape_cast %25 : vector<1x16x20xbf16> to vector<16x20xbf16>
    %cst_26 = arith.constant dense<0.000000e+00> : vector<16x256xf32>
    %27 = tpu.matmul %26, %24, %cst_26 {dimension_numbers = #tpu.dot_dimension_numbers<[1], [0], [0], [1], [0, 0, 1, 1], [], []>} : vector<16x20xbf16>, vector<20x256xbf16>, vector<16x256xf32> -> vector<16x256xf32>
    %28 = arith.addf %20, %27 : vector<16x256xf32>
    %c3_27 = arith.constant 3 : index
    %c0_28 = arith.constant 0 : index
    %c0_29 = arith.constant 0 : index
    %29 = vector.load %arg4[%c3_27, %c0_28, %c0_29] : memref<4x256x256xbf16, #tpu.memory_space<vmem>>, vector<1x256x256xbf16>
    %30 = vector.shape_cast %29 : vector<1x256x256xbf16> to vector<256x256xbf16>
    %cst_30 = arith.constant dense<0.000000e+00> : vector<20x256xf32>
    %31 = tpu.matmul %1, %30, %cst_30 {dimension_numbers = #tpu.dot_dimension_numbers<[1], [0], [0], [1], [0, 0, 1, 1], [], []>} : vector<20x256xbf16>, vector<256x256xbf16>, vector<20x256xf32> -> vector<20x256xf32>
    %32 = arith.truncf %31 : vector<20x256xf32> to vector<20x256xbf16>
    %c4 = arith.constant 4 : index
    %c0_31 = arith.constant 0 : index
    %c0_32 = arith.constant 0 : index
    %33 = vector.load %arg3[%c4, %c0_31, %c0_32] : memref<5x16x20xbf16, #tpu.memory_space<vmem>>, vector<1x16x20xbf16>
    %34 = vector.shape_cast %33 : vector<1x16x20xbf16> to vector<16x20xbf16>
    %cst_33 = arith.constant dense<0.000000e+00> : vector<16x256xf32>
    %35 = tpu.matmul %34, %32, %cst_33 {dimension_numbers = #tpu.dot_dimension_numbers<[1], [0], [0], [1], [0, 0, 1, 1], [], []>} : vector<16x20xbf16>, vector<20x256xbf16>, vector<16x256xf32> -> vector<16x256xf32>
    %36 = arith.addf %28, %35 : vector<16x256xf32>
    %37 = vector.extract_strided_slice %36 {offsets = [0, 0], sizes = [8, 256], strides = [1, 1]} : vector<16x256xf32> to vector<8x256xf32>
    %c0_34 = arith.constant 0 : index
    %c0_35 = arith.constant 0 : index
    %38 = vector.load %arg5[%c0_34, %c0_35] : memref<16x1xf32, #tpu.memory_space<vmem>>, vector<16x1xf32>
    %39 = vector.broadcast %38 : vector<16x1xf32> to vector<16x256xf32>
    %40 = arith.addf %36, %39 : vector<16x256xf32>
    %c0_36 = arith.constant 0 : index
    %c0_37 = arith.constant 0 : index
    %c0_38 = arith.constant 0 : index
    %c0_39 = arith.constant 0 : index
    %41 = vector.load %arg6[%c0_36, %c0_37, %c0_38, %c0_39] : memref<1x1x16x256xf32, #tpu.memory_space<vmem>>, vector<1x1x16x256xf32>
    %42 = vector.shape_cast %41 : vector<1x1x16x256xf32> to vector<16x256xf32>
    %43 = vector.shape_cast %40 : vector<16x256xf32> to vector<1x1x16x256xf32>
    tpu.vector_store %arg6[%c0_36, %c0_37, %c0_38, %c0_39], %43 {strides = array<i32>} : memref<1x1x16x256xf32, #tpu.memory_space<vmem>>, vector<1x1x16x256xf32>,
    %44 = tpu.iota {dimensions = array<i32: 1>} : vector<1x256xi32>
    %c32_i32 = arith.constant 32 : i32
    %c0_i32 = arith.constant 0 : i32
    %45 = arith.cmpi eq, %c32_i32, %c0_i32 : i32
    %c1_i32 = arith.constant 1 : i32
    %46 = arith.select %45, %c1_i32, %c32_i32 : i32
    %47 = vector.broadcast %46 : i32 to vector<1x256xi32>
    %48 = arith.remsi %44, %47 : vector<1x256xi32>
    %c0_i32_40 = arith.constant 0 : i32
    %49 = vector.broadcast %c0_i32_40 : i32 to vector<1x256xi32>
    %50 = arith.cmpi ne, %48, %49 : vector<1x256xi32>
    %c0_i32_41 = arith.constant 0 : i32
    %51 = vector.broadcast %c0_i32_41 : i32 to vector<1x256xi32>
    %52 = arith.cmpi slt, %48, %51 : vector<1x256xi32>
    %c0_i32_42 = arith.constant 0 : i32
    %53 = arith.cmpi slt, %46, %c0_i32_42 : i32
    %54 = vector.broadcast %53 : i1 to vector<1x256xi1>
    %55 = vector.broadcast %54 : vector<1x256xi1> to vector<1x256xi1>
    %56 = arith.xori %52, %55 : vector<1x256xi1>
    %57 = arith.andi %56, %50 : vector<1x256xi1>
    %58 = vector.broadcast %46 : i32 to vector<1x256xi32>
    %59 = arith.addi %48, %58 : vector<1x256xi32>
    %60 = arith.select %57, %59, %48 : vector<1x256xi1>, vector<1x256xi32>
    %c16_i32 = arith.constant 16 : i32
    %61 = vector.broadcast %c16_i32 : i32 to vector<1x256xi32>
    %62 = arith.cmpi slt, %60, %61 : vector<1x256xi32>
    %cst_43 = arith.constant 0.000000e+00 : f32
    %63 = vector.shape_cast %62 : vector<1x256xi1> to vector<1x256xi1>
    %64 = vector.broadcast %63 : vector<1x256xi1> to vector<8x256xi1>
    %65 = vector.broadcast %cst_43 : f32 to vector<8x256xf32>
    %66 = arith.select %64, %37, %65 : vector<8x256xi1>, vector<8x256xf32>
    %c0_i32_44 = arith.constant 0 : i32
    %67 = arith.cmpi eq, %arg1, %c0_i32_44 : i32
    %68 = arith.extui %67 : i1 to i32
    %c0_i32_45 = arith.constant 0 : i32
    %69 = arith.cmpi ne, %68, %c0_i32_45 : i32
    scf.if %69 {
      %cst_60 = arith.constant 0.000000e+00 : f32
      %87 = vector.broadcast %cst_60 : f32 to vector<8x1xf32>
      %c0_61 = arith.constant 0 : index
      %c0_62 = arith.constant 0 : index
      %c0_63 = arith.constant 0 : index
      %88 = vector.load %arg7[%c0_61, %c0_62, %c0_63] : memref<1x8x1xf32, #tpu.memory_space<vmem>>, vector<1x8x1xf32>
      %89 = vector.shape_cast %88 : vector<1x8x1xf32> to vector<8x1xf32>
      %90 = vector.shape_cast %87 : vector<8x1xf32> to vector<1x8x1xf32>
      tpu.vector_store %arg7[%c0_61, %c0_62, %c0_63], %90 {strides = array<i32>} : memref<1x8x1xf32, #tpu.memory_space<vmem>>, vector<1x8x1xf32>,
      %cst_64 = arith.constant 0.000000e+00 : f32
      %91 = vector.broadcast %cst_64 : f32 to vector<8x1xf32>
      %c0_65 = arith.constant 0 : index
      %c0_66 = arith.constant 0 : index
      %c0_67 = arith.constant 0 : index
      %92 = vector.load %arg8[%c0_65, %c0_66, %c0_67] : memref<1x8x1xf32, #tpu.memory_space<vmem>>, vector<1x8x1xf32>
      %93 = vector.shape_cast %92 : vector<1x8x1xf32> to vector<8x1xf32>
      %94 = vector.shape_cast %91 : vector<8x1xf32> to vector<1x8x1xf32>
      tpu.vector_store %arg8[%c0_65, %c0_66, %c0_67], %94 {strides = array<i32>} : memref<1x8x1xf32, #tpu.memory_space<vmem>>, vector<1x8x1xf32>,
    } else {
    }
    %c0_46 = arith.constant 0 : index
    %c0_47 = arith.constant 0 : index
    %c0_48 = arith.constant 0 : index
    %70 = vector.load %arg7[%c0_46, %c0_47, %c0_48] : memref<1x8x1xf32, #tpu.memory_space<vmem>>, vector<1x8x1xf32>
    %71 = vector.shape_cast %70 : vector<1x8x1xf32> to vector<8x1xf32>
    %cst_49 = arith.constant dense<0.000000e+00> : vector<8xf32>
    %72 = vector.multi_reduction <add>, %66, %cst_49 [1] : vector<8x256xf32> to vector<8xf32>
    %73 = vector.shape_cast %72 : vector<8xf32> to vector<8x1xf32>
    %74 = arith.addf %71, %73 : vector<8x1xf32>
    %c0_50 = arith.constant 0 : index
    %c0_51 = arith.constant 0 : index
    %c0_52 = arith.constant 0 : index
    %75 = vector.load %arg7[%c0_50, %c0_51, %c0_52] : memref<1x8x1xf32, #tpu.memory_space<vmem>>, vector<1x8x1xf32>
    %76 = vector.shape_cast %75 : vector<1x8x1xf32> to vector<8x1xf32>
    %77 = vector.shape_cast %74 : vector<8x1xf32> to vector<1x8x1xf32>
    tpu.vector_store %arg7[%c0_50, %c0_51, %c0_52], %77 {strides = array<i32>} : memref<1x8x1xf32, #tpu.memory_space<vmem>>, vector<1x8x1xf32>,
    %c0_53 = arith.constant 0 : index
    %c0_54 = arith.constant 0 : index
    %c0_55 = arith.constant 0 : index
    %78 = vector.load %arg8[%c0_53, %c0_54, %c0_55] : memref<1x8x1xf32, #tpu.memory_space<vmem>>, vector<1x8x1xf32>
    %79 = vector.shape_cast %78 : vector<1x8x1xf32> to vector<8x1xf32>
    %80 = arith.mulf %66, %66 : vector<8x256xf32>
    %cst_56 = arith.constant dense<0.000000e+00> : vector<8xf32>
    %81 = vector.multi_reduction <add>, %80, %cst_56 [1] : vector<8x256xf32> to vector<8xf32>
    %82 = vector.shape_cast %81 : vector<8xf32> to vector<8x1xf32>
    %83 = arith.addf %79, %82 : vector<8x1xf32>
    %c0_57 = arith.constant 0 : index
    %c0_58 = arith.constant 0 : index
    %c0_59 = arith.constant 0 : index
    %84 = vector.load %arg8[%c0_57, %c0_58, %c0_59] : memref<1x8x1xf32, #tpu.memory_space<vmem>>, vector<1x8x1xf32>
    %85 = vector.shape_cast %84 : vector<1x8x1xf32> to vector<8x1xf32>
    %86 = vector.shape_cast %83 : vector<8x1xf32> to vector<1x8x1xf32>
    tpu.vector_store %arg8[%c0_57, %c0_58, %c0_59], %86 {strides = array<i32>} : memref<1x8x1xf32, #tpu.memory_space<vmem>>, vector<1x8x1xf32>,
    return
  }
  func.func @transform_0(%arg0: i32, %arg1: i32) -> (i32, i32, i32, i32) {
    %c0_i32 = arith.constant 0 : i32
    %c0_i32_0 = arith.constant 0 : i32
    %c0_i32_1 = arith.constant 0 : i32
    return %arg0, %arg1, %c0_i32, %c0_i32_0 : i32, i32, i32, i32
  }
  func.func @transform_1(%arg0: i32, %arg1: i32) -> (i32, i32, i32) {
    %c0_i32 = arith.constant 0 : i32
    %c0_i32_0 = arith.constant 0 : i32
    %c0_i32_1 = arith.constant 0 : i32
    %c0_i32_2 = arith.constant 0 : i32
    return %c0_i32, %c0_i32_0, %c0_i32_1 : i32, i32, i32
  }
  func.func @transform_2(%arg0: i32, %arg1: i32) -> (i32, i32, i32) {
    %c0_i32 = arith.constant 0 : i32
    %c0_i32_0 = arith.constant 0 : i32
    %c0_i32_1 = arith.constant 0 : i32
    %c0_i32_2 = arith.constant 0 : i32
    return %c0_i32, %c0_i32_0, %c0_i32_1 : i32, i32, i32
  }
  func.func @transform_3(%arg0: i32, %arg1: i32) -> (i32, i32) {
    %c0_i32 = arith.constant 0 : i32
    %c0_i32_0 = arith.constant 0 : i32
    %c0_i32_1 = arith.constant 0 : i32
    return %c0_i32, %c0_i32_0 : i32, i32
  }
  func.func @transform_4(%arg0: i32, %arg1: i32) -> (i32, i32, i32, i32) {
    %c0_i32 = arith.constant 0 : i32
    %c0_i32_0 = arith.constant 0 : i32
    %c0_i32_1 = arith.constant 0 : i32
    return %arg0, %arg1, %c0_i32, %c0_i32_0 : i32, i32, i32, i32
  }
  func.func @transform_5(%arg0: i32, %arg1: i32) -> (i32, i32, i32) {
    %c0_i32 = arith.constant 0 : i32
    %c0_i32_0 = arith.constant 0 : i32
    %c0_i32_1 = arith.constant 0 : i32
    return %arg0, %c0_i32, %c0_i32_0 : i32, i32, i32
  }
  func.func @transform_6(%arg0: i32, %arg1: i32) -> (i32, i32, i32) {
    %c0_i32 = arith.constant 0 : i32
    %c0_i32_0 = arith.constant 0 : i32
    %c0_i32_1 = arith.constant 0 : i32
    return %arg0, %c0_i32, %c0_i32_0 : i32, i32, i32
  }
}

</mosaic_0001>

<llo_original>
// kernel: conv_block_forward.3
$region0: #{conv_block_forward.3}
  #allocation0 [shape = 'u32[]', space=smem, size = 0x4, offset = 0x4, fixed_abs, tag = 'smem constant byte address 0x4 - core index']
  #allocation1 [shape = 'u32[72,128]{1,0:T(1,128)}', space=vmem, size = 0x9000, scoped, tag = 'internal scratch']
  %s0 = inlined_call_operand.vmem [shape: f32[2,1,16,256], index: 0, kind: input, shape index: {}]
  %s1 = inlined_call_operand.vmem [shape: f32[8,1], index: 1, kind: input, shape index: {}]
  %s2 = inlined_call_operand.vmem [shape: f32[8,1], index: 2, kind: input, shape index: {}]
  %s3 = inlined_call_operand.vmem [shape: f32[2,1,8,256], index: 3, kind: output, shape index: {}]
  %s4 = sld [smem:[#allocation0]]
  $region45: #{conv_block_forward.3} parent=0
    _
  %s6 = ssub.s32 1, %s4
  %s7 = scalar_select 0, %s6, %s4
  loop: start=0, step=1, limit=4
  $region2: #{conv_block_forward.3} parent=0 // loop_pre_header
    _
  $region3: #{conv_block_forward.3} parent=0 // loop_header
    %s9 = sphi 0, %s13
    %p10 = scmp.ge.s32.totalorder %s9, 4
    %s16 = sphi 0, %s28
    %s17 = sphi 0, %s24
    %s18 = sphi 0, %s16
    %s19 = sphi 0, %s17
    %s20 = sphi 0, %s18
    %s21 = sphi 0, %s19
    %s33 = sphi 0, %s35
    %s36 = sphi 0, %s33
    %s37 = sphi 0, %s36
    %s53 = sphi 0, %s37
    %s57 = sphi 0, %s57
    %s59 = sphi 0, %s57
    %s60 = sphi 0, %s59
    %s74 = sphi 0, %s60
    %s78 = sphi 0, %s78
    %s80 = sphi 0, %s78
    %s81 = sphi 0, %s80
    %s95 = sphi 0, %s81
    %s103 = sphi 0, %s105
    %s106 = sphi 0, %s103
    %s107 = sphi 0, %s106
    %s123 = sphi 0, %s107
  $region4: #{conv_block_forward.3} parent=0 // loop_header_branch
    %12 = sbr.rel (%p10) target = $region8
  $region5: #{conv_block_forward.3} parent=0 // loop_body
    %s14 = ssub.s32 %s9, 1
    %s15 = ssub.s32 %s9, 2
    %s22 = sadd.s32 1, %s17
    %p23 = scmp.ge.s32.totalorder %s22, 1
    %s24 = scalar_select %p23, 0, %s22
    %s25 = sadd.s32 1, %s16
    %s26 = scalar_select %p23, %s25, %s16
    %p27 = scmp.ge.s32.totalorder %s26, 2
    %s28 = scalar_select %p27, 0, %s26
    %s29 = ssub.s32 %s16, %s28
    %s30 = ssub.s32 %s17, %s24
    %s31 = sor.u32 %s29, %s30
    %p32 = scmp.eq.s32.totalorder %s31, 0
    %s34 = sadd.s32 %s33, 1
    %s35 = scalar_select %p32, %s33, %s34
    %p38 = pneg %p32
    %p39 = scmp.eq.s32.totalorder %s9, 1
    %p40 = por %p38, %p39
    %p41 = scmp.ne.s32.totalorder %s33, %s36
    %p42 = scmp.eq.s32.totalorder %s9, 0
    %p43 = por %p41, %p42
    %p44 = scmp.ne.s32.totalorder %s33, %s36
    %p45 = scmp.eq.s32.totalorder %s14, 1
    %p46 = por %p44, %p45
    %p47 = scmp.ne.s32.totalorder %s36, %s37
    %p48 = scmp.eq.s32.totalorder %s14, 0
    %p49 = por %p47, %p48
    %p50 = scmp.ne.s32.totalorder %s36, %s37
    %p51 = scmp.eq.s32.totalorder %s15, 1
    %p52 = por %p50, %p51
    %p54 = scmp.ne.s32.totalorder %s37, %s53
    %p55 = scmp.eq.s32.totalorder %s15, 0
    %p56 = por %p54, %p55
    %s58 = sadd.s32 %s57, 1
    %p61 = scmp.eq.s32.totalorder %s9, 1
    %p62 = scmp.ne.s32.totalorder %s57, %s59
    %p63 = scmp.eq.s32.totalorder %s9, 0
    %p64 = por %p62, %p63
    %p65 = scmp.ne.s32.totalorder %s57, %s59
    %p66 = scmp.eq.s32.totalorder %s14, 1
    %p67 = por %p65, %p66
    %p68 = scmp.ne.s32.totalorder %s59, %s60
    %p69 = scmp.eq.s32.totalorder %s14, 0
    %p70 = por %p68, %p69
    %p71 = scmp.ne.s32.totalorder %s59, %s60
    %p72 = scmp.eq.s32.totalorder %s15, 1
    %p73 = por %p71, %p72
    %p75 = scmp.ne.s32.totalorder %s60, %s74
    %p76 = scmp.eq.s32.totalorder %s15, 0
    %p77 = por %p75, %p76
    %s79 = sadd.s32 %s78, 1
    %p82 = scmp.eq.s32.totalorder %s9, 1
    %p83 = scmp.ne.s32.totalorder %s78, %s80
    %p84 = scmp.eq.s32.totalorder %s9, 0
    %p85 = por %p83, %p84
    %p86 = scmp.ne.s32.totalorder %s78, %s80
    %p87 = scmp.eq.s32.totalorder %s14, 1
    %p88 = por %p86, %p87
    %p89 = scmp.ne.s32.totalorder %s80, %s81
    %p90 = scmp.eq.s32.totalorder %s14, 0
    %p91 = por %p89, %p90
    %p92 = scmp.ne.s32.totalorder %s80, %s81
    %p93 = scmp.eq.s32.totalorder %s15, 1
    %p94 = por %p92, %p93
    %p96 = scmp.ne.s32.totalorder %s81, %s95
    %p97 = scmp.eq.s32.totalorder %s15, 0
    %p98 = por %p96, %p97
    %s99 = ssub.s32 %s16, %s28
    %s100 = ssub.s32 %s17, %s24
    %s101 = sor.u32 %s99, %s100
    %p102 = scmp.eq.s32.totalorder %s101, 0
    %s104 = sadd.s32 %s103, 1
    %s105 = scalar_select %p102, %s103, %s104
    %p108 = pneg %p102
    %p109 = scmp.eq.s32.totalorder %s9, 1
    %p110 = por %p108, %p109
    %p111 = scmp.ne.s32.totalorder %s103, %s106
    %p112 = scmp.eq.s32.totalorder %s9, 0
    %p113 = por %p111, %p112
    %p114 = scmp.ne.s32.totalorder %s103, %s106
    %p115 = scmp.eq.s32.totalorder %s14, 1
    %p116 = por %p114, %p115
    %p117 = scmp.ne.s32.totalorder %s106, %s107
    %p118 = scmp.eq.s32.totalorder %s14, 0
    %p119 = por %p117, %p118
    %p120 = scmp.ne.s32.totalorder %s106, %s107
    %p121 = scmp.eq.s32.totalorder %s15, 1
    %p122 = por %p120, %p121
    %p124 = scmp.ne.s32.totalorder %s107, %s123
    %p125 = scmp.eq.s32.totalorder %s15, 0
    %p126 = por %p124, %p125
    %p127 = scmp.le.s32.totalorder 1, %s9
    %p128 = scmp.lt.s32.totalorder %s9, 3
    %p129 = pnand %p127, %p128
    %p130 = pneg %p129
    // Predicated region
    $region9: #{conv_block_forward.3} parent=5 // pred_check
      _
    $region10: #{conv_block_forward.3} parent=5 // pred_check_branch
      %132 = sbr.rel (%p129) target = $region12
    $region11: #{conv_block_forward.3} parent=5 // pred_region
      %s133 = ssub.s32 %s9, 1
      // Predicated region
      $region13: #{conv_block_forward.3} parent=11 // pred_check
        %p134 = pneg %p70
      $region14: #{conv_block_forward.3} parent=11 // pred_check_branch
        %136 = sbr.rel (%p134) target = $region16
      $region15: #{conv_block_forward.3} parent=11 // pred_region
        _
      $region16: #{conv_block_forward.3} parent=11 // pred_fallthru
        _
      // Predicated region
      $region17: #{conv_block_forward.3} parent=11 // pred_check
        %p137 = pneg %p91
      $region18: #{conv_block_forward.3} parent=11 // pred_check_branch
        %139 = sbr.rel (%p137) target = $region20
      $region19: #{conv_block_forward.3} parent=11 // pred_region
        _
      $region20: #{conv_block_forward.3} parent=11 // pred_fallthru
        _
    $region12: #{conv_block_forward.3} parent=5 // pred_fallthru
      _
    %p140 = scmp.lt.s32.totalorder %s9, 2
    // Predicated region
    $region21: #{conv_block_forward.3} parent=5 // pred_check
      %p141 = pneg %p140
    $region22: #{conv_block_forward.3} parent=5 // pred_check_branch
      %143 = sbr.rel (%p141) target = $region24
    $region23: #{conv_block_forward.3} parent=5 // pred_region
      // Predicated region
      $region25: #{conv_block_forward.3} parent=23 // pred_check
        %p144 = pneg %p43
      $region26: #{conv_block_forward.3} parent=23 // pred_check_branch
        %146 = sbr.rel (%p144) target = $region28
      $region27: #{conv_block_forward.3} parent=23 // pred_region
        %p147 = scmp.lt.s32.totalorder %s16, 1
        %s148 = scalar_select %p147, %s16, 1
        %p149 = scmp.lt.s32.totalorder %s17, 0
        %s150 = scalar_select %p149, %s17, 0
        %s151 = smul.addr %s150, 4
        %s152 = smul.addr %s148, 4
        %s153 = sadd.s32 %s151, %s152
        %s154 = smul.addr %s153, 8
        %s155 = scalar_lea.vmem %s0, %s154
      $region28: #{conv_block_forward.3} parent=23 // pred_fallthru
        _
    $region24: #{conv_block_forward.3} parent=5 // pred_fallthru
      _
    %p156 = scmp.le.s32.totalorder 1, %s9
    %p157 = scmp.lt.s32.totalorder %s9, 3
    %p158 = pnand %p156, %p157
    %p159 = pneg %p158
    // Predicated region
    $region29: #{conv_block_forward.3} parent=5 // pred_check
      _
    $region30: #{conv_block_forward.3} parent=5 // pred_check_branch
      %161 = sbr.rel (%p158) target = $region32
    $region31: #{conv_block_forward.3} parent=5 // pred_region
      %s162 = ssub.s32 %s9, 1
      %p163 = scmp.lt.s32.totalorder %s18, 1
      %s164 = scalar_select %p163, %s18, 1
      %p165 = scmp.lt.s32.totalorder %s19, 0
      %s166 = scalar_select %p165, %s19, 0
      %s167 = smul.addr %s166, 4
      %s168 = smul.addr %s164, 4
      %s169 = sadd.s32 %s167, %s168
      %s170 = smul.addr %s169, 8
      %s171 = scalar_lea.vmem %s0, %s170
      %p172 = pneg %p49
      %p173 = pneg %p46
      %p174 = pneg %p70
      %p175 = pneg %p67
      %p176 = pneg %p91
      %p177 = pneg %p88
      %p178 = pneg %p119
      %p179 = pneg %p116
      %p180 = scmp.lt.s32.totalorder %s18, 1
      %s181 = scalar_select %p180, %s18, 1
      %p182 = scmp.lt.s32.totalorder %s19, 0
      %s183 = scalar_select %p182, %s19, 0
      %s184 = smul.addr %s183, 2
      %s185 = smul.addr %s181, 2
      %s186 = sadd.s32 %s184, %s185
      %s187 = smul.addr %s186, 8
      %s188 = scalar_lea.vmem %s3, %s187
      %p189 = scmp.lt.s32.totalorder %s18, 1
      %s190 = scalar_select %p189, %s18, 1
      %p191 = scmp.lt.s32.totalorder %s19, 0
      %s192 = scalar_select %p191, %s19, 0
      %s193 = smul.addr %s192, 4
      %s194 = smul.addr %s190, 4
      %s195 = sadd.s32 %s193, %s194
      %s196 = smul.addr %s195, 8
      %s197 = scalar_lea.vmem %s0, %s196
      %p198 = scmp.lt.s32.totalorder %s18, 1
      %s199 = scalar_select %p198, %s18, 1
      %p200 = scmp.lt.s32.totalorder %s19, 0
      %s201 = scalar_select %p200, %s19, 0
      %s202 = smul.addr %s201, 2
      %s203 = smul.addr %s199, 2
      %s204 = sadd.s32 %s202, %s203
      %s205 = smul.addr %s204, 8
      %s206 = scalar_lea.vmem %s3, %s205
      %v207 = vld [vmem:[%s197] sm:$0xff]
      %v208 = vld [vmem:[%s197 + $0x8] sm:$0xff]
      %v209 = vld [vmem:[%s197 + $0x10] sm:$0xff]
      %v210 = vld [vmem:[%s197 + $0x18] sm:$0xff]
      %v211 = vld [vmem:[%s1] sm:$0xff]
      %213 = vset.pattern.permute.xlu0 0
      %214 = vperm.xlu0 %213, %v211
      %v215 = vpop.permute.xlu0 %214
      %v217 = vmul.f32 %v207, %v215
      %v218 = vmul.f32 %v208, %v215
      %v219 = vld [vmem:[%s2] sm:$0xff]
      %221 = vset.pattern.permute.xlu0 0
      %222 = vperm.xlu0 %221, %v219
      %v223 = vpop.permute.xlu0 %222
      %v225 = vadd.f32 %v217, %v223
      %v226 = vadd.f32 %v218, %v223
      %v227 = vmax.f32 %v225, 0.0
      %v228 = vmax.f32 %v226, 0.0
      %v229 = vadd.f32 %v227, %v209
      %v230 = vadd.f32 %v228, %v210
      %231 = vst [vmem:[%s206] sm:$0xff] %v229
      %232 = vst [vmem:[%s206 + $0x8] sm:$0xff] %v230
      %p233 = scmp.lt.s32.totalorder %s18, 1
      %s234 = scalar_select %p233, %s18, 1
      %p235 = scmp.lt.s32.totalorder %s19, 0
      %s236 = scalar_select %p235, %s19, 0
      %s237 = smul.addr %s236, 2
      %s238 = smul.addr %s234, 2
      %s239 = sadd.s32 %s237, %s238
      %s240 = smul.addr %s239, 8
      %s241 = scalar_lea.vmem %s3, %s240
      // Predicated region
      $region33: #{conv_block_forward.3} parent=31 // pred_check
        %p242 = pneg %p116
      $region34: #{conv_block_forward.3} parent=31 // pred_check_branch
        %244 = sbr.rel (%p242) target = $region36
      $region35: #{conv_block_forward.3} parent=31 // pred_region
        _
      $region36: #{conv_block_forward.3} parent=31 // pred_fallthru
        _
    $region32: #{conv_block_forward.3} parent=5 // pred_fallthru
      _
    %p245 = scmp.le.s32.totalorder 2, %s9
    // Predicated region
    $region37: #{conv_block_forward.3} parent=5 // pred_check
      %p246 = pneg %p245
    $region38: #{conv_block_forward.3} parent=5 // pred_check_branch
      %248 = sbr.rel (%p246) target = $region40
    $region39: #{conv_block_forward.3} parent=5 // pred_region
      %s249 = ssub.s32 %s9, 2
      // Predicated region
      $region41: #{conv_block_forward.3} parent=39 // pred_check
        %p250 = pneg %p122
      $region42: #{conv_block_forward.3} parent=39 // pred_check_branch
        %252 = sbr.rel (%p250) target = $region44
      $region43: #{conv_block_forward.3} parent=39 // pred_region
        %p253 = scmp.lt.s32.totalorder %s20, 1
        %s254 = scalar_select %p253, %s20, 1
        %p255 = scmp.lt.s32.totalorder %s21, 0
        %s256 = scalar_select %p255, %s21, 0
        %s257 = smul.addr %s256, 2
        %s258 = smul.addr %s254, 2
        %s259 = sadd.s32 %s257, %s258
        %s260 = smul.addr %s259, 8
        %s261 = scalar_lea.vmem %s3, %s260
      $region44: #{conv_block_forward.3} parent=39 // pred_fallthru
        _
    $region40: #{conv_block_forward.3} parent=5 // pred_fallthru
      _
  $region6: #{conv_block_forward.3} parent=0 // loop_footer
    %s13 = sadd.s32 1, %s9
  $region7: #{conv_block_forward.3} parent=0 // loop_footer_branch
    %8 = sbr.rel target = $region3
  $region8: #{conv_block_forward.3} parent=0 // loop_exit
    _

// kernel: conv_block_forward.2
$region0: #{conv_block_forward.2}
  #allocation0 [shape = 'u32[]', space=smem, size = 0x4, offset = 0x4, fixed_abs, tag = 'smem constant byte address 0x4 - core index']
  #allocation1 [shape = 'u32[72,128]{1,0:T(1,128)}', space=vmem, size = 0x9000, scoped, tag = 'internal scratch']
  %s0 = inlined_call_operand.vmem [shape: bf16[2,1,20,256], index: 0, kind: input, shape index: {}]
  %s1 = inlined_call_operand.vmem [shape: bf16[5,16,20], index: 1, kind: input, shape index: {}]
  %s2 = inlined_call_operand.vmem [shape: bf16[4,256,256], index: 2, kind: input, shape index: {}]
  %s3 = inlined_call_operand.vmem [shape: f32[16,1], index: 3, kind: input, shape index: {}]
  %s4 = inlined_call_operand.vmem [shape: f32[2,1,16,256], index: 4, kind: output, shape index: {0}]
  %s5 = inlined_call_operand.vmem [shape: f32[2,8,1], index: 5, kind: output, shape index: {1}]
  %s6 = inlined_call_operand.vmem [shape: f32[2,8,1], index: 6, kind: output, shape index: {2}]
  %7 = xla_tuple %s4, %s5, %s6
  %s8 = sld [smem:[#allocation0]]
  $region69: #{conv_block_forward.2} parent=0
    _
  %s10 = ssub.s32 1, %s8
  %s11 = scalar_select 0, %s10, %s8
  loop: start=0, step=1, limit=4
  $region2: #{conv_block_forward.2} parent=0 // loop_pre_header
    _
  $region3: #{conv_block_forward.2} parent=0 // loop_header
    %s13 = sphi 0, %s17
    %p14 = scmp.ge.s32.totalorder %s13, 4
    %s20 = sphi 0, %s32
    %s21 = sphi 0, %s28
    %s22 = sphi 0, %s20
    %s23 = sphi 0, %s21
    %s24 = sphi 0, %s22
    %s25 = sphi 0, %s23
    %s37 = sphi 0, %s39
    %s40 = sphi 0, %s37
    %s41 = sphi 0, %s40
    %s57 = sphi 0, %s41
    %s61 = sphi 0, %s61
    %s63 = sphi 0, %s61
    %s64 = sphi 0, %s63
    %s78 = sphi 0, %s64
    %s82 = sphi 0, %s82
    %s84 = sphi 0, %s82
    %s85 = sphi 0, %s84
    %s99 = sphi 0, %s85
    %s103 = sphi 0, %s103
    %s105 = sphi 0, %s103
    %s106 = sphi 0, %s105
    %s120 = sphi 0, %s106
    %s128 = sphi 0, %s130
    %s131 = sphi 0, %s128
    %s132 = sphi 0, %s131
    %s148 = sphi 0, %s132
    %s154 = sphi 0, %s156
    %s157 = sphi 0, %s154
    %s158 = sphi 0, %s157
    %s174 = sphi 0, %s158
    %s180 = sphi 0, %s182
    %s183 = sphi 0, %s180
    %s184 = sphi 0, %s183
    %s200 = sphi 0, %s184
  $region4: #{conv_block_forward.2} parent=0 // loop_header_branch
    %16 = sbr.rel (%p14) target = $region8
  $region5: #{conv_block_forward.2} parent=0 // loop_body
    %s18 = ssub.s32 %s13, 1
    %s19 = ssub.s32 %s13, 2
    %s26 = sadd.s32 1, %s21
    %p27 = scmp.ge.s32.totalorder %s26, 1
    %s28 = scalar_select %p27, 0, %s26
    %s29 = sadd.s32 1, %s20
    %s30 = scalar_select %p27, %s29, %s20
    %p31 = scmp.ge.s32.totalorder %s30, 2
    %s32 = scalar_select %p31, 0, %s30
    %s33 = ssub.s32 %s20, %s32
    %s34 = ssub.s32 %s21, %s28
    %s35 = sor.u32 %s33, %s34
    %p36 = scmp.eq.s32.totalorder %s35, 0
    %s38 = sadd.s32 %s37, 1
    %s39 = scalar_select %p36, %s37, %s38
    %p42 = pneg %p36
    %p43 = scmp.eq.s32.totalorder %s13, 1
    %p44 = por %p42, %p43
    %p45 = scmp.ne.s32.totalorder %s37, %s40
    %p46 = scmp.eq.s32.totalorder %s13, 0
    %p47 = por %p45, %p46
    %p48 = scmp.ne.s32.totalorder %s37, %s40
    %p49 = scmp.eq.s32.totalorder %s18, 1
    %p50 = por %p48, %p49
    %p51 = scmp.ne.s32.totalorder %s40, %s41
    %p52 = scmp.eq.s32.totalorder %s18, 0
    %p53 = por %p51, %p52
    %p54 = scmp.ne.s32.totalorder %s40, %s41
    %p55 = scmp.eq.s32.totalorder %s19, 1
    %p56 = por %p54, %p55
    %p58 = scmp.ne.s32.totalorder %s41, %s57
    %p59 = scmp.eq.s32.totalorder %s19, 0
    %p60 = por %p58, %p59
    %s62 = sadd.s32 %s61, 1
    %p65 = scmp.eq.s32.totalorder %s13, 1
    %p66 = scmp.ne.s32.totalorder %s61, %s63
    %p67 = scmp.eq.s32.totalorder %s13, 0
    %p68 = por %p66, %p67
    %p69 = scmp.ne.s32.totalorder %s61, %s63
    %p70 = scmp.eq.s32.totalorder %s18, 1
    %p71 = por %p69, %p70
    %p72 = scmp.ne.s32.totalorder %s63, %s64
    %p73 = scmp.eq.s32.totalorder %s18, 0
    %p74 = por %p72, %p73
    %p75 = scmp.ne.s32.totalorder %s63, %s64
    %p76 = scmp.eq.s32.totalorder %s19, 1
    %p77 = por %p75, %p76
    %p79 = scmp.ne.s32.totalorder %s64, %s78
    %p80 = scmp.eq.s32.totalorder %s19, 0
    %p81 = por %p79, %p80
    %s83 = sadd.s32 %s82, 1
    %p86 = scmp.eq.s32.totalorder %s13, 1
    %p87 = scmp.ne.s32.totalorder %s82, %s84
    %p88 = scmp.eq.s32.totalorder %s13, 0
    %p89 = por %p87, %p88
    %p90 = scmp.ne.s32.totalorder %s82, %s84
    %p91 = scmp.eq.s32.totalorder %s18, 1
    %p92 = por %p90, %p91
    %p93 = scmp.ne.s32.totalorder %s84, %s85
    %p94 = scmp.eq.s32.totalorder %s18, 0
    %p95 = por %p93, %p94
    %p96 = scmp.ne.s32.totalorder %s84, %s85
    %p97 = scmp.eq.s32.totalorder %s19, 1
    %p98 = por %p96, %p97
    %p100 = scmp.ne.s32.totalorder %s85, %s99
    %p101 = scmp.eq.s32.totalorder %s19, 0
    %p102 = por %p100, %p101
    %s104 = sadd.s32 %s103, 1
    %p107 = scmp.eq.s32.totalorder %s13, 1
    %p108 = scmp.ne.s32.totalorder %s103, %s105
    %p109 = scmp.eq.s32.totalorder %s13, 0
    %p110 = por %p108, %p109
    %p111 = scmp.ne.s32.totalorder %s103, %s105
    %p112 = scmp.eq.s32.totalorder %s18, 1
    %p113 = por %p111, %p112
    %p114 = scmp.ne.s32.totalorder %s105, %s106
    %p115 = scmp.eq.s32.totalorder %s18, 0
    %p116 = por %p114, %p115
    %p117 = scmp.ne.s32.totalorder %s105, %s106
    %p118 = scmp.eq.s32.totalorder %s19, 1
    %p119 = por %p117, %p118
    %p121 = scmp.ne.s32.totalorder %s106, %s120
    %p122 = scmp.eq.s32.totalorder %s19, 0
    %p123 = por %p121, %p122
    %s124 = ssub.s32 %s20, %s32
    %s125 = ssub.s32 %s21, %s28
    %s126 = sor.u32 %s124, %s125
    %p127 = scmp.eq.s32.totalorder %s126, 0
    %s129 = sadd.s32 %s128, 1
    %s130 = scalar_select %p127, %s128, %s129
    %p133 = pneg %p127
    %p134 = scmp.eq.s32.totalorder %s13, 1
    %p135 = por %p133, %p134
    %p136 = scmp.ne.s32.totalorder %s128, %s131
    %p137 = scmp.eq.s32.totalorder %s13, 0
    %p138 = por %p136, %p137
    %p139 = scmp.ne.s32.totalorder %s128, %s131
    %p140 = scmp.eq.s32.totalorder %s18, 1
    %p141 = por %p139, %p140
    %p142 = scmp.ne.s32.totalorder %s131, %s132
    %p143 = scmp.eq.s32.totalorder %s18, 0
    %p144 = por %p142, %p143
    %p145 = scmp.ne.s32.totalorder %s131, %s132
    %p146 = scmp.eq.s32.totalorder %s19, 1
    %p147 = por %p145, %p146
    %p149 = scmp.ne.s32.totalorder %s132, %s148
    %p150 = scmp.eq.s32.totalorder %s19, 0
    %p151 = por %p149, %p150
    %s152 = ssub.s32 %s20, %s32
    %p153 = scmp.eq.s32.totalorder %s152, 0
    %s155 = sadd.s32 %s154, 1
    %s156 = scalar_select %p153, %s154, %s155
    %p159 = pneg %p153
    %p160 = scmp.eq.s32.totalorder %s13, 1
    %p161 = por %p159, %p160
    %p162 = scmp.ne.s32.totalorder %s154, %s157
    %p163 = scmp.eq.s32.totalorder %s13, 0
    %p164 = por %p162, %p163
    %p165 = scmp.ne.s32.totalorder %s154, %s157
    %p166 = scmp.eq.s32.totalorder %s18, 1
    %p167 = por %p165, %p166
    %p168 = scmp.ne.s32.totalorder %s157, %s158
    %p169 = scmp.eq.s32.totalorder %s18, 0
    %p170 = por %p168, %p169
    %p171 = scmp.ne.s32.totalorder %s157, %s158
    %p172 = scmp.eq.s32.totalorder %s19, 1
    %p173 = por %p171, %p172
    %p175 = scmp.ne.s32.totalorder %s158, %s174
    %p176 = scmp.eq.s32.totalorder %s19, 0
    %p177 = por %p175, %p176
    %s178 = ssub.s32 %s20, %s32
    %p179 = scmp.eq.s32.totalorder %s178, 0
    %s181 = sadd.s32 %s180, 1
    %s182 = scalar_select %p179, %s180, %s181
    %p185 = pneg %p179
    %p186 = scmp.eq.s32.totalorder %s13, 1
    %p187 = por %p185, %p186
    %p188 = scmp.ne.s32.totalorder %s180, %s183
    %p189 = scmp.eq.s32.totalorder %s13, 0
    %p190 = por %p188, %p189
    %p191 = scmp.ne.s32.totalorder %s180, %s183
    %p192 = scmp.eq.s32.totalorder %s18, 1
    %p193 = por %p191, %p192
    %p194 = scmp.ne.s32.totalorder %s183, %s184
    %p195 = scmp.eq.s32.totalorder %s18, 0
    %p196 = por %p194, %p195
    %p197 = scmp.ne.s32.totalorder %s183, %s184
    %p198 = scmp.eq.s32.totalorder %s19, 1
    %p199 = por %p197, %p198
    %p201 = scmp.ne.s32.totalorder %s184, %s200
    %p202 = scmp.eq.s32.totalorder %s19, 0
    %p203 = por %p201, %p202
    %p204 = scmp.le.s32.totalorder 1, %s13
    %p205 = scmp.lt.s32.totalorder %s13, 3
    %p206 = pnand %p204, %p205
    %p207 = pneg %p206
    // Predicated region
    $region9: #{conv_block_forward.2} parent=5 // pred_check
      _
    $region10: #{conv_block_forward.2} parent=5 // pred_check_branch
      %209 = sbr.rel (%p206) target = $region12
    $region11: #{conv_block_forward.2} parent=5 // pred_region
      %s210 = ssub.s32 %s13, 1
      // Predicated region
      $region13: #{conv_block_forward.2} parent=11 // pred_check
        %p211 = pneg %p74
      $region14: #{conv_block_forward.2} parent=11 // pred_check_branch
        %213 = sbr.rel (%p211) target = $region16
      $region15: #{conv_block_forward.2} parent=11 // pred_region
        _
      $region16: #{conv_block_forward.2} parent=11 // pred_fallthru
        _
      // Predicated region
      $region17: #{conv_block_forward.2} parent=11 // pred_check
        %p214 = pneg %p95
      $region18: #{conv_block_forward.2} parent=11 // pred_check_branch
        %216 = sbr.rel (%p214) target = $region20
      $region19: #{conv_block_forward.2} parent=11 // pred_region
        _
      $region20: #{conv_block_forward.2} parent=11 // pred_fallthru
        _
      // Predicated region
      $region21: #{conv_block_forward.2} parent=11 // pred_check
        %p217 = pneg %p116
      $region22: #{conv_block_forward.2} parent=11 // pred_check_branch
        %219 = sbr.rel (%p217) target = $region24
      $region23: #{conv_block_forward.2} parent=11 // pred_region
        _
      $region24: #{conv_block_forward.2} parent=11 // pred_fallthru
        _
    $region12: #{conv_block_forward.2} parent=5 // pred_fallthru
      _
    %p220 = scmp.lt.s32.totalorder %s13, 2
    // Predicated region
    $region25: #{conv_block_forward.2} parent=5 // pred_check
      %p221 = pneg %p220
    $region26: #{conv_block_forward.2} parent=5 // pred_check_branch
      %223 = sbr.rel (%p221) target = $region28
    $region27: #{conv_block_forward.2} parent=5 // pred_region
      // Predicated region
      $region29: #{conv_block_forward.2} parent=27 // pred_check
        %p224 = pneg %p47
      $region30: #{conv_block_forward.2} parent=27 // pred_check_branch
        %226 = sbr.rel (%p224) target = $region32
      $region31: #{conv_block_forward.2} parent=27 // pred_region
        %p227 = scmp.lt.s32.totalorder %s20, 1
        %s228 = scalar_select %p227, %s20, 1
        %p229 = scmp.lt.s32.totalorder %s21, 0
        %s230 = scalar_select %p229, %s21, 0
        %s231 = smul.addr %s230, 6
        %s232 = smul.addr %s228, 6
        %s233 = sadd.s32 %s231, %s232
        %s234 = smul.addr %s233, 4
        %s235 = scalar_lea.vmem %s0, %s234
      $region32: #{conv_block_forward.2} parent=27 // pred_fallthru
        _
    $region28: #{conv_block_forward.2} parent=5 // pred_fallthru
      _
    %p236 = scmp.le.s32.totalorder 1, %s13
    %p237 = scmp.lt.s32.totalorder %s13, 3
    %p238 = pnand %p236, %p237
    %p239 = pneg %p238
    // Predicated region
    $region33: #{conv_block_forward.2} parent=5 // pred_check
      _
    $region34: #{conv_block_forward.2} parent=5 // pred_check_branch
      %241 = sbr.rel (%p238) target = $region36
    $region35: #{conv_block_forward.2} parent=5 // pred_region
      %s242 = ssub.s32 %s13, 1
      %p243 = scmp.lt.s32.totalorder %s22, 1
      %s244 = scalar_select %p243, %s22, 1
      %p245 = scmp.lt.s32.totalorder %s23, 0
      %s246 = scalar_select %p245, %s23, 0
      %s247 = smul.addr %s246, 6
      %s248 = smul.addr %s244, 6
      %s249 = sadd.s32 %s247, %s248
      %s250 = smul.addr %s249, 4
      %s251 = scalar_lea.vmem %s0, %s250
      %p252 = pneg %p53
      %p253 = pneg %p50
      %p254 = pneg %p74
      %p255 = pneg %p71
      %p256 = pneg %p95
      %p257 = pneg %p92
      %p258 = pneg %p116
      %p259 = pneg %p113
      %p260 = pneg %p144
      %p261 = pneg %p141
      %p262 = scmp.lt.s32.totalorder %s22, 1
      %s263 = scalar_select %p262, %s22, 1
      %p264 = scmp.lt.s32.totalorder %s23, 0
      %s265 = scalar_select %p264, %s23, 0
      %s266 = smul.addr %s265, 4
      %s267 = smul.addr %s263, 4
      %s268 = sadd.s32 %s266, %s267
      %s269 = smul.addr %s268, 8
      %s270 = scalar_lea.vmem %s4, %s269
      %p271 = pneg %p170
      %p272 = pneg %p167
      %p273 = scmp.lt.s32.totalorder %s22, 1
      %s274 = scalar_select %p273, %s22, 1
      %s275 = smul.addr %s274, 8
      %s276 = scalar_lea.vmem %s5, %s275
      %p277 = pneg %p196
      %p278 = pneg %p193
      %p279 = scmp.lt.s32.totalorder %s22, 1
      %s280 = scalar_select %p279, %s22, 1
      %s281 = smul.addr %s280, 8
      %s282 = scalar_lea.vmem %s6, %s281
      %p283 = scmp.lt.s32.totalorder %s22, 1
      %s284 = scalar_select %p283, %s22, 1
      %p285 = scmp.lt.s32.totalorder %s23, 0
      %s286 = scalar_select %p285, %s23, 0
      %s287 = smul.addr %s286, 6
      %s288 = smul.addr %s284, 6
      %s289 = sadd.s32 %s287, %s288
      %s290 = smul.addr %s289, 4
      %s291 = scalar_lea.vmem %s0, %s290
      %p292 = scmp.lt.s32.totalorder %s22, 1
      %s293 = scalar_select %p292, %s22, 1
      %p294 = scmp.lt.s32.totalorder %s23, 0
      %s295 = scalar_select %p294, %s23, 0
      %s296 = smul.addr %s295, 4
      %s297 = smul.addr %s293, 4
      %s298 = sadd.s32 %s296, %s297
      %s299 = smul.addr %s298, 8
      %s300 = scalar_lea.vmem %s4, %s299
      %p301 = scmp.lt.s32.totalorder %s22, 1
      %s302 = scalar_select %p301, %s22, 1
      %s303 = smul.addr %s302, 8
      %s304 = scalar_lea.vmem %s5, %s303
      %p305 = scmp.lt.s32.totalorder %s22, 1
      %s306 = scalar_select %p305, %s22, 1
      %s307 = smul.addr %s306, 8
      %s308 = scalar_lea.vmem %s6, %s307
      %v310 = vld [vmem:[%s291] sm:$0xff]
      %v311 = vld [vmem:[%s291 + $0x8] sm:$0xff]
      %v312 = vld [vmem:[%s291 + $0x10] sm:$0x33]
      %v313 = vld [vmem:[%s1] sm:$0xf]
      %v314 = vld [vmem:[%s1 + $0x4] sm:$0xf]
      %v315 = vld [vmem:[%s2] sm:$0xff]
      %v316 = vld [vmem:[%s2 + $0x8] sm:$0xff]
      %v317 = vld [vmem:[%s2 + $0x10] sm:$0xff]
      %v318 = vld [vmem:[%s2 + $0x18] sm:$0xff]
      %v319 = vld [vmem:[%s2 + $0x20] sm:$0xff]
      %v320 = vld [vmem:[%s2 + $0x28] sm:$0xff]
      %v321 = vld [vmem:[%s2 + $0x30] sm:$0xff]
      %v322 = vld [vmem:[%s2 + $0x38] sm:$0xff]
      %v323 = vld [vmem:[%s2 + $0x40] sm:$0xff]
      %v324 = vld [vmem:[%s2 + $0x48] sm:$0xff]
      %v325 = vld [vmem:[%s2 + $0x50] sm:$0xff]
      %v326 = vld [vmem:[%s2 + $0x58] sm:$0xff]
      %v327 = vld [vmem:[%s2 + $0x60] sm:$0xff]
      %v328 = vld [vmem:[%s2 + $0x68] sm:$0xff]
      %v329 = vld [vmem:[%s2 + $0x70] sm:$0xff]
      %v330 = vld [vmem:[%s2 + $0x78] sm:$0xff]
      %v331 = vld [vmem:[%s2 + $0x80] sm:$0xff]
      %v332 = vld [vmem:[%s2 + $0x88] sm:$0xff]
      %v333 = vld [vmem:[%s2 + $0x90] sm:$0xff]
      %v334 = vld [vmem:[%s2 + $0x98] sm:$0xff]
      %v335 = vld [vmem:[%s2 + $0xa0] sm:$0xff]
      %v336 = vld [vmem:[%s2 + $0xa8] sm:$0xff]
      %v337 = vld [vmem:[%s2 + $0xb0] sm:$0xff]
      %v338 = vld [vmem:[%s2 + $0xb8] sm:$0xff]
      %v339 = vld [vmem:[%s2 + $0xc0] sm:$0xff]
      %v340 = vld [vmem:[%s2 + $0xc8] sm:$0xff]
      %v341 = vld [vmem:[%s2 + $0xd0] sm:$0xff]
      %v342 = vld [vmem:[%s2 + $0xd8] sm:$0xff]
      %v343 = vld [vmem:[%s2 + $0xe0] sm:$0xff]
      %v344 = vld [vmem:[%s2 + $0xe8] sm:$0xff]
      %v345 = vld [vmem:[%s2 + $0xf0] sm:$0xff]
      %v346 = vld [vmem:[%s2 + $0xf8] sm:$0xff]
      %v350 = vunpack.c.l.b16 %v310
      %v351 = vunpack.c.h.b16 %v310
      %v352 = vunpack.c.l.b16 %v311
      %v353 = vunpack.c.h.b16 %v311
      %v354 = vunpack.c.l.b16 %v312
      %v355 = vunpack.c.h.b16 %v312
      %v356 = vpack.c.b16 %v352, %v350
      %v357 = vpack.c.b16 %v353, %v351
      %v358 = vpack.c.b16 %v354, %v354
      %v359 = vpack.c.b16 %v355, %v355
      %v396 = vunpack.c.l.b16 %v315
      %v397 = vunpack.c.h.b16 %v315
      %v398 = vunpack.c.l.b16 %v316
      %v399 = vunpack.c.h.b16 %v316
      %v400 = vunpack.c.l.b16 %v317
      %v401 = vunpack.c.h.b16 %v317
      %v402 = vunpack.c.l.b16 %v318
      %v403 = vunpack.c.h.b16 %v318
      %v404 = vunpack.c.l.b16 %v319
      %v405 = vunpack.c.h.b16 %v319
      %v406 = vunpack.c.l.b16 %v320
      %v407 = vunpack.c.h.b16 %v320
      %v408 = vunpack.c.l.b16 %v321
      %v409 = vunpack.c.h.b16 %v321
      %v410 = vunpack.c.l.b16 %v322
      %v411 = vunpack.c.h.b16 %v322
      %v412 = vunpack.c.l.b16 %v323
      %v413 = vunpack.c.h.b16 %v323
      %v414 = vunpack.c.l.b16 %v324
      %v415 = vunpack.c.h.b16 %v324
      %v416 = vunpack.c.l.b16 %v325
      %v417 = vunpack.c.h.b16 %v325
      %v418 = vunpack.c.l.b16 %v326
      %v419 = vunpack.c.h.b16 %v326
      %v420 = vunpack.c.l.b16 %v327
      %v421 = vunpack.c.h.b16 %v327
      %v422 = vunpack.c.l.b16 %v328
      %v423 = vunpack.c.h.b16 %v328
      %v424 = vunpack.c.l.b16 %v329
      %v425 = vunpack.c.h.b16 %v329
      %v426 = vunpack.c.l.b16 %v330
      %v427 = vunpack.c.h.b16 %v330
      %v428 = vunpack.c.l.b16 %v331
      %v429 = vunpack.c.h.b16 %v331
      %v430 = vunpack.c.l.b16 %v332
      %v431 = vunpack.c.h.b16 %v332
      %v432 = vunpack.c.l.b16 %v333
      %v433 = vunpack.c.h.b16 %v333
      %v434 = vunpack.c.l.b16 %v334
      %v435 = vunpack.c.h.b16 %v334
      %v436 = vunpack.c.l.b16 %v335
      %v437 = vunpack.c.h.b16 %v335
      %v438 = vunpack.c.l.b16 %v336
      %v439 = vunpack.c.h.b16 %v336
      %v440 = vunpack.c.l.b16 %v337
      %v441 = vunpack.c.h.b16 %v337
      %v442 = vunpack.c.l.b16 %v338
      %v443 = vunpack.c.h.b16 %v338
      %v444 = vunpack.c.l.b16 %v339
      %v445 = vunpack.c.h.b16 %v339
      %v446 = vunpack.c.l.b16 %v340
      %v447 = vunpack.c.h.b16 %v340
      %v448 = vunpack.c.l.b16 %v341
      %v449 = vunpack.c.h.b16 %v341
      %v450 = vunpack.c.l.b16 %v342
      %v451 = vunpack.c.h.b16 %v342
      %v452 = vunpack.c.l.b16 %v343
      %v453 = vunpack.c.h.b16 %v343
      %v454 = vunpack.c.l.b16 %v344
      %v455 = vunpack.c.h.b16 %v344
      %v456 = vunpack.c.l.b16 %v345
      %v457 = vunpack.c.h.b16 %v345
      %v458 = vunpack.c.l.b16 %v346
      %v459 = vunpack.c.h.b16 %v346
      %v460 = vpack.c.b16 %v398, %v396
      %v461 = vpack.c.b16 %v399, %v397
      %v462 = vpack.c.b16 %v402, %v400
      %v463 = vpack.c.b16 %v403, %v401
      %v464 = vpack.c.b16 %v406, %v404
      %v465 = vpack.c.b16 %v407, %v405
      %v466 = vpack.c.b16 %v410, %v408
      %v467 = vpack.c.b16 %v411, %v409
      %v468 = vpack.c.b16 %v414, %v412
      %v469 = vpack.c.b16 %v415, %v413
      %v470 = vpack.c.b16 %v418, %v416
      %v471 = vpack.c.b16 %v419, %v417
      %v472 = vpack.c.b16 %v422, %v420
      %v473 = vpack.c.b16 %v423, %v421
      %v474 = vpack.c.b16 %v426, %v424
      %v475 = vpack.c.b16 %v427, %v425
      %v476 = vpack.c.b16 %v430, %v428
      %v477 = vpack.c.b16 %v431, %v429
      %v478 = vpack.c.b16 %v434, %v432
      %v479 = vpack.c.b16 %v435, %v433
      %v480 = vpack.c.b16 %v438, %v436
      %v481 = vpack.c.b16 %v439, %v437
      %v482 = vpack.c.b16 %v442, %v440
      %v483 = vpack.c.b16 %v443, %v441
      %v484 = vpack.c.b16 %v446, %v444
      %v485 = vpack.c.b16 %v447, %v445
      %v486 = vpack.c.b16 %v450, %v448
      %v487 = vpack.c.b16 %v451, %v449
      %v488 = vpack.c.b16 %v454, %v452
      %v489 = vpack.c.b16 %v455, %v453
      %v490 = vpack.c.b16 %v458, %v456
      %v491 = vpack.c.b16 %v459, %v457
      %524 = vmatpush.bf16.msra.mxu0 %v474
      %525 = vmatpush.bf16.msra.mxu0 %v472
      %526 = vmatpush.bf16.msra.mxu0 %v470
      %527 = vmatpush.bf16.msra.mxu0 %v468
      %528 = vmatpush.bf16.msra.mxu0 %v466
      %529 = vmatpush.bf16.msra.mxu0 %v464
      %530 = vmatpush.bf16.msra.mxu0 %v462
      %531 = vmatpush.bf16.msra.mxu0 %v460
      %532 = vmatmul.bf16.gmra.mxu0 %v356
      %v533 = vpop.f32.mrf.mxu0
      %v534 = vadd.f32 0.0, %v533
      %v535 = vpop.f32.mrf.mxu0
      %v536 = vadd.f32 0.0, %v535
      %537 = vmatmul.bf16.gmra.mxu0 %v358
      %v538 = vpop.f32.mrf.mxu0
      %v539 = vadd.f32 0.0, %v538
      %v540 = vpop.f32.mrf.mxu0
      %541 = vdwg.mxu0
      %542 = vmatpush.bf16.msra.mxu0 %v490
      %543 = vmatpush.bf16.msra.mxu0 %v488
      %544 = vmatpush.bf16.msra.mxu0 %v486
      %545 = vmatpush.bf16.msra.mxu0 %v484
      %546 = vmatpush.bf16.msra.mxu0 %v482
      %547 = vmatpush.bf16.msra.mxu0 %v480
      %548 = vmatpush.bf16.msra.mxu0 %v478
      %549 = vmatpush.bf16.msra.mxu0 %v476
      %550 = vmatmul.bf16.gmra.mxu0 %v357
      %v551 = vpop.f32.mrf.mxu0
      %v552 = vadd.f32 %v534, %v551
      %v553 = vpop.f32.mrf.mxu0
      %v554 = vadd.f32 %v536, %v553
      %555 = vmatmul.bf16.gmra.mxu0 %v359
      %v556 = vpop.f32.mrf.mxu0
      %v557 = vadd.f32 %v539, %v556
      %v558 = vpop.f32.mrf.mxu0
      %559 = vdwg.mxu0
      %560 = vmatpush.bf16.msra.mxu0 %v475
      %561 = vmatpush.bf16.msra.mxu0 %v473
      %562 = vmatpush.bf16.msra.mxu0 %v471
      %563 = vmatpush.bf16.msra.mxu0 %v469
      %564 = vmatpush.bf16.msra.mxu0 %v467
      %565 = vmatpush.bf16.msra.mxu0 %v465
      %566 = vmatpush.bf16.msra.mxu0 %v463
      %567 = vmatpush.bf16.msra.mxu0 %v461
      %568 = vmatmul.bf16.gmra.mxu0 %v356
      %v569 = vpop.f32.mrf.mxu0
      %v570 = vadd.f32 0.0, %v569
      %v571 = vpop.f32.mrf.mxu0
      %v572 = vadd.f32 0.0, %v571
      %573 = vmatmul.bf16.gmra.mxu0 %v358
      %v574 = vpop.f32.mrf.mxu0
      %v575 = vadd.f32 0.0, %v574
      %v576 = vpop.f32.mrf.mxu0
      %577 = vdwg.mxu0
      %578 = vmatpush.bf16.msra.mxu0 %v491
      %579 = vmatpush.bf16.msra.mxu0 %v489
      %580 = vmatpush.bf16.msra.mxu0 %v487
      %581 = vmatpush.bf16.msra.mxu0 %v485
      %582 = vmatpush.bf16.msra.mxu0 %v483
      %583 = vmatpush.bf16.msra.mxu0 %v481
      %584 = vmatpush.bf16.msra.mxu0 %v479
      %585 = vmatpush.bf16.msra.mxu0 %v477
      %586 = vmatmul.bf16.gmra.mxu0 %v357
      %v587 = vpop.f32.mrf.mxu0
      %v588 = vadd.f32 %v570, %v587
      %v589 = vpop.f32.mrf.mxu0
      %v590 = vadd.f32 %v572, %v589
      %591 = vmatmul.bf16.gmra.mxu0 %v359
      %v592 = vpop.f32.mrf.mxu0
      %v593 = vadd.f32 %v575, %v592
      %v594 = vpop.f32.mrf.mxu0
      %595 = vdwg.mxu0
      %v596 = vpack.c.bf16 %v554, %v552
      %v597 = vpack.c.bf16 %v590, %v588
      %v598 = vpack.c.bf16 %v557, %v557
      %v599 = vpack.c.bf16 %v593, %v593
      %s600 = scalar_lea.vmem %s1, 8
      %v601 = vld [vmem:[%s600] sm:$0xf]
      %v602 = vld [vmem:[%s600 + $0x4] sm:$0xf]
      %v605 = vunpack.c.l.b16 %v601
      %v606 = vunpack.c.l.b16 %v602
      %v607 = vpack.c.b16 %v606, %v605
      %vm608 = vcmask 162816
      %v610 = vsel %vm608, %v607, 0
      %vm612 = vcmask 1041408
      %v614 = vsel %vm612, %v598, 0
      %v617 = vsel %vm612, %v599, 0
      %619 = vmatpush.bf16.msra.mxu0 0
      %620 = vmatpush.bf16.msra.mxu0 0
      %621 = vmatpush.bf16.msra.mxu0 0
      %622 = vmatpush.bf16.msra.mxu0 0
      %623 = vmatpush.bf16.msra.mxu0 0
      %624 = vmatpush.bf16.msra.mxu0 0
      %625 = vmatpush.bf16.msra.mxu0 %v614
      %626 = vmatpush.bf16.msra.mxu0 %v596
      %627 = vmatmul.bf16.gmra.mxu0 %v610
      %v628 = vpop.f32.mrf.mxu0
      %v629 = vadd.f32 0.0, %v628
      %v630 = vpop.f32.mrf.mxu0
      %v631 = vadd.f32 0.0, %v630
      %632 = vdwg.mxu0
      %633 = vmatpush.bf16.msra.mxu0 0
      %634 = vmatpush.bf16.msra.mxu0 0
      %635 = vmatpush.bf16.msra.mxu0 0
      %636 = vmatpush.bf16.msra.mxu0 0
      %637 = vmatpush.bf16.msra.mxu0 0
      %638 = vmatpush.bf16.msra.mxu0 0
      %639 = vmatpush.bf16.msra.mxu0 %v617
      %640 = vmatpush.bf16.msra.mxu0 %v597
      %641 = vmatmul.bf16.gmra.mxu0 %v610
      %v642 = vpop.f32.mrf.mxu0
      %v643 = vadd.f32 0.0, %v642
      %v644 = vpop.f32.mrf.mxu0
      %v645 = vadd.f32 0.0, %v644
      %646 = vdwg.mxu0
      %v649 = vunpack.c.l.b16 %v313
      %v650 = vunpack.c.l.b16 %v314
      %v651 = vpack.c.b16 %v650, %v649
      %v653 = vsel %vm608, %v651, 0
      %v656 = vsel %vm612, %v358, 0
      %v659 = vsel %vm612, %v359, 0
      %661 = vmatpush.bf16.msra.mxu0 0
      %662 = vmatpush.bf16.msra.mxu0 0
      %663 = vmatpush.bf16.msra.mxu0 0
      %664 = vmatpush.bf16.msra.mxu0 0
      %665 = vmatpush.bf16.msra.mxu0 0
      %666 = vmatpush.bf16.msra.mxu0 0
      %667 = vmatpush.bf16.msra.mxu0 %v656
      %668 = vmatpush.bf16.msra.mxu0 %v356
      %669 = vmatmul.bf16.gmra.mxu0 %v653
      %v670 = vpop.f32.mrf.mxu0
      %v671 = vadd.f32 %v629, %v670
      %v672 = vpop.f32.mrf.mxu0
      %v673 = vadd.f32 %v631, %v672
      %674 = vdwg.mxu0
      %675 = vmatpush.bf16.msra.mxu0 0
      %676 = vmatpush.bf16.msra.mxu0 0
      %677 = vmatpush.bf16.msra.mxu0 0
      %678 = vmatpush.bf16.msra.mxu0 0
      %679 = vmatpush.bf16.msra.mxu0 0
      %680 = vmatpush.bf16.msra.mxu0 0
      %681 = vmatpush.bf16.msra.mxu0 %v659
      %682 = vmatpush.bf16.msra.mxu0 %v357
      %683 = vmatmul.bf16.gmra.mxu0 %v653
      %v684 = vpop.f32.mrf.mxu0
      %v685 = vadd.f32 %v643, %v684
      %v686 = vpop.f32.mrf.mxu0
      %v687 = vadd.f32 %v645, %v686
      %688 = vdwg.mxu0
      %s689 = scalar_lea.vmem %s2, 256
      %v690 = vld [vmem:[%s689] sm:$0xff]
      %v691 = vld [vmem:[%s689 + $0x8] sm:$0xff]
      %v692 = vld [vmem:[%s689 + $0x10] sm:$0xff]
      %v693 = vld [vmem:[%s689 + $0x18] sm:$0xff]
      %v694 = vld [vmem:[%s689 + $0x20] sm:$0xff]
      %v695 = vld [vmem:[%s689 + $0x28] sm:$0xff]
      %v696 = vld [vmem:[%s689 + $0x30] sm:$0xff]
      %v697 = vld [vmem:[%s689 + $0x38] sm:$0xff]
      %v698 = vld [vmem:[%s689 + $0x40] sm:$0xff]
      %v699 = vld [vmem:[%s689 + $0x48] sm:$0xff]
      %v700 = vld [vmem:[%s689 + $0x50] sm:$0xff]
      %v701 = vld [vmem:[%s689 + $0x58] sm:$0xff]
      %v702 = vld [vmem:[%s689 + $0x60] sm:$0xff]
      %v703 = vld [vmem:[%s689 + $0x68] sm:$0xff]
      %v704 = vld [vmem:[%s689 + $0x70] sm:$0xff]
      %v705 = vld [vmem:[%s689 + $0x78] sm:$0xff]
      %v706 = vld [vmem:[%s689 + $0x80] sm:$0xff]
      %v707 = vld [vmem:[%s689 + $0x88] sm:$0xff]
      %v708 = vld [vmem:[%s689 + $0x90] sm:$0xff]
      %v709 = vld [vmem:[%s689 + $0x98] sm:$0xff]
      %v710 = vld [vmem:[%s689 + $0xa0] sm:$0xff]
      %v711 = vld [vmem:[%s689 + $0xa8] sm:$0xff]
      %v712 = vld [vmem:[%s689 + $0xb0] sm:$0xff]
      %v713 = vld [vmem:[%s689 + $0xb8] sm:$0xff]
      %v714 = vld [vmem:[%s689 + $0xc0] sm:$0xff]
      %v715 = vld [vmem:[%s689 + $0xc8] sm:$0xff]
      %v716 = vld [vmem:[%s689 + $0xd0] sm:$0xff]
      %v717 = vld [vmem:[%s689 + $0xd8] sm:$0xff]
      %v718 = vld [vmem:[%s689 + $0xe0] sm:$0xff]
      %v719 = vld [vmem:[%s689 + $0xe8] sm:$0xff]
      %v720 = vld [vmem:[%s689 + $0xf0] sm:$0xff]
      %v721 = vld [vmem:[%s689 + $0xf8] sm:$0xff]
      %v754 = vunpack.c.l.b16 %v690
      %v755 = vunpack.c.h.b16 %v690
      %v756 = vunpack.c.l.b16 %v691
      %v757 = vunpack.c.h.b16 %v691
      %v758 = vunpack.c.l.b16 %v692
      %v759 = vunpack.c.h.b16 %v692
      %v760 = vunpack.c.l.b16 %v693
      %v761 = vunpack.c.h.b16 %v693
      %v762 = vunpack.c.l.b16 %v694
      %v763 = vunpack.c.h.b16 %v694
      %v764 = vunpack.c.l.b16 %v695
      %v765 = vunpack.c.h.b16 %v695
      %v766 = vunpack.c.l.b16 %v696
      %v767 = vunpack.c.h.b16 %v696
      %v768 = vunpack.c.l.b16 %v697
      %v769 = vunpack.c.h.b16 %v697
      %v770 = vunpack.c.l.b16 %v698
      %v771 = vunpack.c.h.b16 %v698
      %v772 = vunpack.c.l.b16 %v699
      %v773 = vunpack.c.h.b16 %v699
      %v774 = vunpack.c.l.b16 %v700
      %v775 = vunpack.c.h.b16 %v700
      %v776 = vunpack.c.l.b16 %v701
      %v777 = vunpack.c.h.b16 %v701
      %v778 = vunpack.c.l.b16 %v702
      %v779 = vunpack.c.h.b16 %v702
      %v780 = vunpack.c.l.b16 %v703
      %v781 = vunpack.c.h.b16 %v703
      %v782 = vunpack.c.l.b16 %v704
      %v783 = vunpack.c.h.b16 %v704
      %v784 = vunpack.c.l.b16 %v705
      %v785 = vunpack.c.h.b16 %v705
      %v786 = vunpack.c.l.b16 %v706
      %v787 = vunpack.c.h.b16 %v706
      %v788 = vunpack.c.l.b16 %v707
      %v789 = vunpack.c.h.b16 %v707
      %v790 = vunpack.c.l.b16 %v708
      %v791 = vunpack.c.h.b16 %v708
      %v792 = vunpack.c.l.b16 %v709
      %v793 = vunpack.c.h.b16 %v709
      %v794 = vunpack.c.l.b16 %v710
      %v795 = vunpack.c.h.b16 %v710
      %v796 = vunpack.c.l.b16 %v711
      %v797 = vunpack.c.h.b16 %v711
      %v798 = vunpack.c.l.b16 %v712
      %v799 = vunpack.c.h.b16 %v712
      %v800 = vunpack.c.l.b16 %v713
      %v801 = vunpack.c.h.b16 %v713
      %v802 = vunpack.c.l.b16 %v714
      %v803 = vunpack.c.h.b16 %v714
      %v804 = vunpack.c.l.b16 %v715
      %v805 = vunpack.c.h.b16 %v715
      %v806 = vunpack.c.l.b16 %v716
      %v807 = vunpack.c.h.b16 %v716
      %v808 = vunpack.c.l.b16 %v717
      %v809 = vunpack.c.h.b16 %v717
      %v810 = vunpack.c.l.b16 %v718
      %v811 = vunpack.c.h.b16 %v718
      %v812 = vunpack.c.l.b16 %v719
      %v813 = vunpack.c.h.b16 %v719
      %v814 = vunpack.c.l.b16 %v720
      %v815 = vunpack.c.h.b16 %v720
      %v816 = vunpack.c.l.b16 %v721
      %v817 = vunpack.c.h.b16 %v721
      %v818 = vpack.c.b16 %v756, %v754
      %v819 = vpack.c.b16 %v757, %v755
      %v820 = vpack.c.b16 %v760, %v758
      %v821 = vpack.c.b16 %v761, %v759
      %v822 = vpack.c.b16 %v764, %v762
      %v823 = vpack.c.b16 %v765, %v763
      %v824 = vpack.c.b16 %v768, %v766
      %v825 = vpack.c.b16 %v769, %v767
      %v826 = vpack.c.b16 %v772, %v770
      %v827 = vpack.c.b16 %v773, %v771
      %v828 = vpack.c.b16 %v776, %v774
      %v829 = vpack.c.b16 %v777, %v775
      %v830 = vpack.c.b16 %v780, %v778
      %v831 = vpack.c.b16 %v781, %v779
      %v832 = vpack.c.b16 %v784, %v782
      %v833 = vpack.c.b16 %v785, %v783
      %v834 = vpack.c.b16 %v788, %v786
      %v835 = vpack.c.b16 %v789, %v787
      %v836 = vpack.c.b16 %v792, %v790
      %v837 = vpack.c.b16 %v793, %v791
      %v838 = vpack.c.b16 %v796, %v794
      %v839 = vpack.c.b16 %v797, %v795
      %v840 = vpack.c.b16 %v800, %v798
      %v841 = vpack.c.b16 %v801, %v799
      %v842 = vpack.c.b16 %v804, %v802
      %v843 = vpack.c.b16 %v805, %v803
      %v844 = vpack.c.b16 %v808, %v806
      %v845 = vpack.c.b16 %v809, %v807
      %v846 = vpack.c.b16 %v812, %v810
      %v847 = vpack.c.b16 %v813, %v811
      %v848 = vpack.c.b16 %v816, %v814
      %v849 = vpack.c.b16 %v817, %v815
      %882 = vmatpush.bf16.msra.mxu0 %v832
      %883 = vmatpush.bf16.msra.mxu0 %v830
      %884 = vmatpush.bf16.msra.mxu0 %v828
      %885 = vmatpush.bf16.msra.mxu0 %v826
      %886 = vmatpush.bf16.msra.mxu0 %v824
      %887 = vmatpush.bf16.msra.mxu0 %v822
      %888 = vmatpush.bf16.msra.mxu0 %v820
      %889 = vmatpush.bf16.msra.mxu0 %v818
      %890 = vmatmul.bf16.gmra.mxu0 %v356
      %v891 = vpop.f32.mrf.mxu0
      %v892 = vadd.f32 0.0, %v891
      %v893 = vpop.f32.mrf.mxu0
      %v894 = vadd.f32 0.0, %v893
      %895 = vmatmul.bf16.gmra.mxu0 %v358
      %v896 = vpop.f32.mrf.mxu0
      %v897 = vadd.f32 0.0, %v896
      %v898 = vpop.f32.mrf.mxu0
      %899 = vdwg.mxu0
      %900 = vmatpush.bf16.msra.mxu0 %v848
      %901 = vmatpush.bf16.msra.mxu0 %v846
      %902 = vmatpush.bf16.msra.mxu0 %v844
      %903 = vmatpush.bf16.msra.mxu0 %v842
      %904 = vmatpush.bf16.msra.mxu0 %v840
      %905 = vmatpush.bf16.msra.mxu0 %v838
      %906 = vmatpush.bf16.msra.mxu0 %v836
      %907 = vmatpush.bf16.msra.mxu0 %v834
      %908 = vmatmul.bf16.gmra.mxu0 %v357
      %v909 = vpop.f32.mrf.mxu0
      %v910 = vadd.f32 %v892, %v909
      %v911 = vpop.f32.mrf.mxu0
      %v912 = vadd.f32 %v894, %v911
      %913 = vmatmul.bf16.gmra.mxu0 %v359
      %v914 = vpop.f32.mrf.mxu0
      %v915 = vadd.f32 %v897, %v914
      %v916 = vpop.f32.mrf.mxu0
      %917 = vdwg.mxu0
      %918 = vmatpush.bf16.msra.mxu0 %v833
      %919 = vmatpush.bf16.msra.mxu0 %v831
      %920 = vmatpush.bf16.msra.mxu0 %v829
      %921 = vmatpush.bf16.msra.mxu0 %v827
      %922 = vmatpush.bf16.msra.mxu0 %v825
      %923 = vmatpush.bf16.msra.mxu0 %v823
      %924 = vmatpush.bf16.msra.mxu0 %v821
      %925 = vmatpush.bf16.msra.mxu0 %v819
      %926 = vmatmul.bf16.gmra.mxu0 %v356
      %v927 = vpop.f32.mrf.mxu0
      %v928 = vadd.f32 0.0, %v927
      %v929 = vpop.f32.mrf.mxu0
      %v930 = vadd.f32 0.0, %v929
      %931 = vmatmul.bf16.gmra.mxu0 %v358
      %v932 = vpop.f32.mrf.mxu0
      %v933 = vadd.f32 0.0, %v932
      %v934 = vpop.f32.mrf.mxu0
      %935 = vdwg.mxu0
      %936 = vmatpush.bf16.msra.mxu0 %v849
      %937 = vmatpush.bf16.msra.mxu0 %v847
      %938 = vmatpush.bf16.msra.mxu0 %v845
      %939 = vmatpush.bf16.msra.mxu0 %v843
      %940 = vmatpush.bf16.msra.mxu0 %v841
      %941 = vmatpush.bf16.msra.mxu0 %v839
      %942 = vmatpush.bf16.msra.mxu0 %v837
      %943 = vmatpush.bf16.msra.mxu0 %v835
      %944 = vmatmul.bf16.gmra.mxu0 %v357
      %v945 = vpop.f32.mrf.mxu0
      %v946 = vadd.f32 %v928, %v945
      %v947 = vpop.f32.mrf.mxu0
      %v948 = vadd.f32 %v930, %v947
      %949 = vmatmul.bf16.gmra.mxu0 %v359
      %v950 = vpop.f32.mrf.mxu0
      %v951 = vadd.f32 %v933, %v950
      %v952 = vpop.f32.mrf.mxu0
      %953 = vdwg.mxu0
      %v954 = vpack.c.bf16 %v912, %v910
      %v955 = vpack.c.bf16 %v948, %v946
      %v956 = vpack.c.bf16 %v915, %v915
      %v957 = vpack.c.bf16 %v951, %v951
      %s958 = scalar_lea.vmem %s1, 16
      %v959 = vld [vmem:[%s958] sm:$0xf]
      %v960 = vld [vmem:[%s958 + $0x4] sm:$0xf]
      %v963 = vunpack.c.l.b16 %v959
      %v964 = vunpack.c.l.b16 %v960
      %v965 = vpack.c.b16 %v964, %v963
      %v967 = vsel %vm608, %v965, 0
      %v970 = vsel %vm612, %v956, 0
      %v973 = vsel %vm612, %v957, 0
      %975 = vmatpush.bf16.msra.mxu0 0
      %976 = vmatpush.bf16.msra.mxu0 0
      %977 = vmatpush.bf16.msra.mxu0 0
      %978 = vmatpush.bf16.msra.mxu0 0
      %979 = vmatpush.bf16.msra.mxu0 0
      %980 = vmatpush.bf16.msra.mxu0 0
      %981 = vmatpush.bf16.msra.mxu0 %v970
      %982 = vmatpush.bf16.msra.mxu0 %v954
      %983 = vmatmul.bf16.gmra.mxu0 %v967
      %v984 = vpop.f32.mrf.mxu0
      %v985 = vadd.f32 0.0, %v984
      %v986 = vpop.f32.mrf.mxu0
      %v987 = vadd.f32 0.0, %v986
      %988 = vdwg.mxu0
      %989 = vmatpush.bf16.msra.mxu0 0
      %990 = vmatpush.bf16.msra.mxu0 0
      %991 = vmatpush.bf16.msra.mxu0 0
      %992 = vmatpush.bf16.msra.mxu0 0
      %993 = vmatpush.bf16.msra.mxu0 0
      %994 = vmatpush.bf16.msra.mxu0 0
      %995 = vmatpush.bf16.msra.mxu0 %v973
      %996 = vmatpush.bf16.msra.mxu0 %v955
      %997 = vmatmul.bf16.gmra.mxu0 %v967
      %v998 = vpop.f32.mrf.mxu0
      %v999 = vadd.f32 0.0, %v998
      %v1000 = vpop.f32.mrf.mxu0
      %v1001 = vadd.f32 0.0, %v1000
      %1002 = vdwg.mxu0
      %v1003 = vadd.f32 %v671, %v985
      %v1004 = vadd.f32 %v685, %v999
      %v1005 = vadd.f32 %v673, %v987
      %v1006 = vadd.f32 %v687, %v1001
      %s1007 = scalar_lea.vmem %s2, 512
      %v1008 = vld [vmem:[%s1007] sm:$0xff]
      %v1009 = vld [vmem:[%s1007 + $0x8] sm:$0xff]
      %v1010 = vld [vmem:[%s1007 + $0x10] sm:$0xff]
      %v1011 = vld [vmem:[%s1007 + $0x18] sm:$0xff]
      %v1012 = vld [vmem:[%s1007 + $0x20] sm:$0xff]
      %v1013 = vld [vmem:[%s1007 + $0x28] sm:$0xff]
      %v1014 = vld [vmem:[%s1007 + $0x30] sm:$0xff]
      %v1015 = vld [vmem:[%s1007 + $0x38] sm:$0xff]
      %v1016 = vld [vmem:[%s1007 + $0x40] sm:$0xff]
      %v1017 = vld [vmem:[%s1007 + $0x48] sm:$0xff]
      %v1018 = vld [vmem:[%s1007 + $0x50] sm:$0xff]
      %v1019 = vld [vmem:[%s1007 + $0x58] sm:$0xff]
      %v1020 = vld [vmem:[%s1007 + $0x60] sm:$0xff]
      %v1021 = vld [vmem:[%s1007 + $0x68] sm:$0xff]
      %v1022 = vld [vmem:[%s1007 + $0x70] sm:$0xff]
      %v1023 = vld [vmem:[%s1007 + $0x78] sm:$0xff]
      %v1024 = vld [vmem:[%s1007 + $0x80] sm:$0xff]
      %v1025 = vld [vmem:[%s1007 + $0x88] sm:$0xff]
      %v1026 = vld [vmem:[%s1007 + $0x90] sm:$0xff]
      %v1027 = vld [vmem:[%s1007 + $0x98] sm:$0xff]
      %v1028 = vld [vmem:[%s1007 + $0xa0] sm:$0xff]
      %v1029 = vld [vmem:[%s1007 + $0xa8] sm:$0xff]
      %v1030 = vld [vmem:[%s1007 + $0xb0] sm:$0xff]
      %v1031 = vld [vmem:[%s1007 + $0xb8] sm:$0xff]
      %v1032 = vld [vmem:[%s1007 + $0xc0] sm:$0xff]
      %v1033 = vld [vmem:[%s1007 + $0xc8] sm:$0xff]
      %v1034 = vld [vmem:[%s1007 + $0xd0] sm:$0xff]
      %v1035 = vld [vmem:[%s1007 + $0xd8] sm:$0xff]
      %v1036 = vld [vmem:[%s1007 + $0xe0] sm:$0xff]
      %v1037 = vld [vmem:[%s1007 + $0xe8] sm:$0xff]
      %v1038 = vld [vmem:[%s1007 + $0xf0] sm:$0xff]
      %v1039 = vld [vmem:[%s1007 + $0xf8] sm:$0xff]
      %v1072 = vunpack.c.l.b16 %v1008
      %v1073 = vunpack.c.h.b16 %v1008
      %v1074 = vunpack.c.l.b16 %v1009
      %v1075 = vunpack.c.h.b16 %v1009
      %v1076 = vunpack.c.l.b16 %v1010
      %v1077 = vunpack.c.h.b16 %v1010
      %v1078 = vunpack.c.l.b16 %v1011
      %v1079 = vunpack.c.h.b16 %v1011
      %v1080 = vunpack.c.l.b16 %v1012
      %v1081 = vunpack.c.h.b16 %v1012
      %v1082 = vunpack.c.l.b16 %v1013
      %v1083 = vunpack.c.h.b16 %v1013
      %v1084 = vunpack.c.l.b16 %v1014
      %v1085 = vunpack.c.h.b16 %v1014
      %v1086 = vunpack.c.l.b16 %v1015
      %v1087 = vunpack.c.h.b16 %v1015
      %v1088 = vunpack.c.l.b16 %v1016
      %v1089 = vunpack.c.h.b16 %v1016
      %v1090 = vunpack.c.l.b16 %v1017
      %v1091 = vunpack.c.h.b16 %v1017
      %v1092 = vunpack.c.l.b16 %v1018
      %v1093 = vunpack.c.h.b16 %v1018
      %v1094 = vunpack.c.l.b16 %v1019
      %v1095 = vunpack.c.h.b16 %v1019
      %v1096 = vunpack.c.l.b16 %v1020
      %v1097 = vunpack.c.h.b16 %v1020
      %v1098 = vunpack.c.l.b16 %v1021
      %v1099 = vunpack.c.h.b16 %v1021
      %v1100 = vunpack.c.l.b16 %v1022
      %v1101 = vunpack.c.h.b16 %v1022
      %v1102 = vunpack.c.l.b16 %v1023
      %v1103 = vunpack.c.h.b16 %v1023
      %v1104 = vunpack.c.l.b16 %v1024
      %v1105 = vunpack.c.h.b16 %v1024
      %v1106 = vunpack.c.l.b16 %v1025
      %v1107 = vunpack.c.h.b16 %v1025
      %v1108 = vunpack.c.l.b16 %v1026
      %v1109 = vunpack.c.h.b16 %v1026
      %v1110 = vunpack.c.l.b16 %v1027
      %v1111 = vunpack.c.h.b16 %v1027
      %v1112 = vunpack.c.l.b16 %v1028
      %v1113 = vunpack.c.h.b16 %v1028
      %v1114 = vunpack.c.l.b16 %v1029
      %v1115 = vunpack.c.h.b16 %v1029
      %v1116 = vunpack.c.l.b16 %v1030
      %v1117 = vunpack.c.h.b16 %v1030
      %v1118 = vunpack.c.l.b16 %v1031
      %v1119 = vunpack.c.h.b16 %v1031
      %v1120 = vunpack.c.l.b16 %v1032
      %v1121 = vunpack.c.h.b16 %v1032
      %v1122 = vunpack.c.l.b16 %v1033
      %v1123 = vunpack.c.h.b16 %v1033
      %v1124 = vunpack.c.l.b16 %v1034
      %v1125 = vunpack.c.h.b16 %v1034
      %v1126 = vunpack.c.l.b16 %v1035
      %v1127 = vunpack.c.h.b16 %v1035
      %v1128 = vunpack.c.l.b16 %v1036
      %v1129 = vunpack.c.h.b16 %v1036
      %v1130 = vunpack.c.l.b16 %v1037
      %v1131 = vunpack.c.h.b16 %v1037
      %v1132 = vunpack.c.l.b16 %v1038
      %v1133 = vunpack.c.h.b16 %v1038
      %v1134 = vunpack.c.l.b16 %v1039
      %v1135 = vunpack.c.h.b16 %v1039
      %v1136 = vpack.c.b16 %v1074, %v1072
      %v1137 = vpack.c.b16 %v1075, %v1073
      %v1138 = vpack.c.b16 %v1078, %v1076
      %v1139 = vpack.c.b16 %v1079, %v1077
      %v1140 = vpack.c.b16 %v1082, %v1080
      %v1141 = vpack.c.b16 %v1083, %v1081
      %v1142 = vpack.c.b16 %v1086, %v1084
      %v1143 = vpack.c.b16 %v1087, %v1085
      %v1144 = vpack.c.b16 %v1090, %v1088
      %v1145 = vpack.c.b16 %v1091, %v1089
      %v1146 = vpack.c.b16 %v1094, %v1092
      %v1147 = vpack.c.b16 %v1095, %v1093
      %v1148 = vpack.c.b16 %v1098, %v1096
      %v1149 = vpack.c.b16 %v1099, %v1097
      %v1150 = vpack.c.b16 %v1102, %v1100
      %v1151 = vpack.c.b16 %v1103, %v1101
      %v1152 = vpack.c.b16 %v1106, %v1104
      %v1153 = vpack.c.b16 %v1107, %v1105
      %v1154 = vpack.c.b16 %v1110, %v1108
      %v1155 = vpack.c.b16 %v1111, %v1109
      %v1156 = vpack.c.b16 %v1114, %v1112
      %v1157 = vpack.c.b16 %v1115, %v1113
      %v1158 = vpack.c.b16 %v1118, %v1116
      %v1159 = vpack.c.b16 %v1119, %v1117
      %v1160 = vpack.c.b16 %v1122, %v1120
      %v1161 = vpack.c.b16 %v1123, %v1121
      %v1162 = vpack.c.b16 %v1126, %v1124
      %v1163 = vpack.c.b16 %v1127, %v1125
      %v1164 = vpack.c.b16 %v1130, %v1128
      %v1165 = vpack.c.b16 %v1131, %v1129
      %v1166 = vpack.c.b16 %v1134, %v1132
      %v1167 = vpack.c.b16 %v1135, %v1133
      %1200 = vmatpush.bf16.msra.mxu0 %v1150
      %1201 = vmatpush.bf16.msra.mxu0 %v1148
      %1202 = vmatpush.bf16.msra.mxu0 %v1146
      %1203 = vmatpush.bf16.msra.mxu0 %v1144
      %1204 = vmatpush.bf16.msra.mxu0 %v1142
      %1205 = vmatpush.bf16.msra.mxu0 %v1140
      %1206 = vmatpush.bf16.msra.mxu0 %v1138
      %1207 = vmatpush.bf16.msra.mxu0 %v1136
      %1208 = vmatmul.bf16.gmra.mxu0 %v356
      %v1209 = vpop.f32.mrf.mxu0
      %v1210 = vadd.f32 0.0, %v1209
      %v1211 = vpop.f32.mrf.mxu0
      %v1212 = vadd.f32 0.0, %v1211
      %1213 = vmatmul.bf16.gmra.mxu0 %v358
      %v1214 = vpop.f32.mrf.mxu0
      %v1215 = vadd.f32 0.0, %v1214
      %v1216 = vpop.f32.mrf.mxu0
      %1217 = vdwg.mxu0
      %1218 = vmatpush.bf16.msra.mxu0 %v1166
      %1219 = vmatpush.bf16.msra.mxu0 %v1164
      %1220 = vmatpush.bf16.msra.mxu0 %v1162
      %1221 = vmatpush.bf16.msra.mxu0 %v1160
      %1222 = vmatpush.bf16.msra.mxu0 %v1158
      %1223 = vmatpush.bf16.msra.mxu0 %v1156
      %1224 = vmatpush.bf16.msra.mxu0 %v1154
      %1225 = vmatpush.bf16.msra.mxu0 %v1152
      %1226 = vmatmul.bf16.gmra.mxu0 %v357
      %v1227 = vpop.f32.mrf.mxu0
      %v1228 = vadd.f32 %v1210, %v1227
      %v1229 = vpop.f32.mrf.mxu0
      %v1230 = vadd.f32 %v1212, %v1229
      %1231 = vmatmul.bf16.gmra.mxu0 %v359
      %v1232 = vpop.f32.mrf.mxu0
      %v1233 = vadd.f32 %v1215, %v1232
      %v1234 = vpop.f32.mrf.mxu0
      %1235 = vdwg.mxu0
      %1236 = vmatpush.bf16.msra.mxu0 %v1151
      %1237 = vmatpush.bf16.msra.mxu0 %v1149
      %1238 = vmatpush.bf16.msra.mxu0 %v1147
      %1239 = vmatpush.bf16.msra.mxu0 %v1145
      %1240 = vmatpush.bf16.msra.mxu0 %v1143
      %1241 = vmatpush.bf16.msra.mxu0 %v1141
      %1242 = vmatpush.bf16.msra.mxu0 %v1139
      %1243 = vmatpush.bf16.msra.mxu0 %v1137
      %1244 = vmatmul.bf16.gmra.mxu0 %v356
      %v1245 = vpop.f32.mrf.mxu0
      %v1246 = vadd.f32 0.0, %v1245
      %v1247 = vpop.f32.mrf.mxu0
      %v1248 = vadd.f32 0.0, %v1247
      %1249 = vmatmul.bf16.gmra.mxu0 %v358
      %v1250 = vpop.f32.mrf.mxu0
      %v1251 = vadd.f32 0.0, %v1250
      %v1252 = vpop.f32.mrf.mxu0
      %1253 = vdwg.mxu0
      %1254 = vmatpush.bf16.msra.mxu0 %v1167
      %1255 = vmatpush.bf16.msra.mxu0 %v1165
      %1256 = vmatpush.bf16.msra.mxu0 %v1163
      %1257 = vmatpush.bf16.msra.mxu0 %v1161
      %1258 = vmatpush.bf16.msra.mxu0 %v1159
      %1259 = vmatpush.bf16.msra.mxu0 %v1157
      %1260 = vmatpush.bf16.msra.mxu0 %v1155
      %1261 = vmatpush.bf16.msra.mxu0 %v1153
      %1262 = vmatmul.bf16.gmra.mxu0 %v357
      %v1263 = vpop.f32.mrf.mxu0
      %v1264 = vadd.f32 %v1246, %v1263
      %v1265 = vpop.f32.mrf.mxu0
      %v1266 = vadd.f32 %v1248, %v1265
      %1267 = vmatmul.bf16.gmra.mxu0 %v359
      %v1268 = vpop.f32.mrf.mxu0
      %v1269 = vadd.f32 %v1251, %v1268
      %v1270 = vpop.f32.mrf.mxu0
      %1271 = vdwg.mxu0
      %v1272 = vpack.c.bf16 %v1230, %v1228
      %v1273 = vpack.c.bf16 %v1266, %v1264
      %v1274 = vpack.c.bf16 %v1233, %v1233
      %v1275 = vpack.c.bf16 %v1269, %v1269
      %s1276 = scalar_lea.vmem %s1, 24
      %v1277 = vld [vmem:[%s1276] sm:$0xf]
      %v1278 = vld [vmem:[%s1276 + $0x4] sm:$0xf]
      %v1281 = vunpack.c.l.b16 %v1277
      %v1282 = vunpack.c.l.b16 %v1278
      %v1283 = vpack.c.b16 %v1282, %v1281
      %v1285 = vsel %vm608, %v1283, 0
      %v1288 = vsel %vm612, %v1274, 0
      %v1291 = vsel %vm612, %v1275, 0
      %1293 = vmatpush.bf16.msra.mxu0 0
      %1294 = vmatpush.bf16.msra.mxu0 0
      %1295 = vmatpush.bf16.msra.mxu0 0
      %1296 = vmatpush.bf16.msra.mxu0 0
      %1297 = vmatpush.bf16.msra.mxu0 0
      %1298 = vmatpush.bf16.msra.mxu0 0
      %1299 = vmatpush.bf16.msra.mxu0 %v1288
      %1300 = vmatpush.bf16.msra.mxu0 %v1272
      %1301 = vmatmul.bf16.gmra.mxu0 %v1285
      %v1302 = vpop.f32.mrf.mxu0
      %v1303 = vadd.f32 0.0, %v1302
      %v1304 = vpop.f32.mrf.mxu0
      %v1305 = vadd.f32 0.0, %v1304
      %1306 = vdwg.mxu0
      %1307 = vmatpush.bf16.msra.mxu0 0
      %1308 = vmatpush.bf16.msra.mxu0 0
      %1309 = vmatpush.bf16.msra.mxu0 0
      %1310 = vmatpush.bf16.msra.mxu0 0
      %1311 = vmatpush.bf16.msra.mxu0 0
      %1312 = vmatpush.bf16.msra.mxu0 0
      %1313 = vmatpush.bf16.msra.mxu0 %v1291
      %1314 = vmatpush.bf16.msra.mxu0 %v1273
      %1315 = vmatmul.bf16.gmra.mxu0 %v1285
      %v1316 = vpop.f32.mrf.mxu0
      %v1317 = vadd.f32 0.0, %v1316
      %v1318 = vpop.f32.mrf.mxu0
      %v1319 = vadd.f32 0.0, %v1318
      %1320 = vdwg.mxu0
      %v1321 = vadd.f32 %v1003, %v1303
      %v1322 = vadd.f32 %v1004, %v1317
      %v1323 = vadd.f32 %v1005, %v1305
      %v1324 = vadd.f32 %v1006, %v1319
      %s1325 = scalar_lea.vmem %s2, 768
      %v1326 = vld [vmem:[%s1325] sm:$0xff]
      %v1327 = vld [vmem:[%s1325 + $0x8] sm:$0xff]
      %v1328 = vld [vmem:[%s1325 + $0x10] sm:$0xff]
      %v1329 = vld [vmem:[%s1325 + $0x18] sm:$0xff]
      %v1330 = vld [vmem:[%s1325 + $0x20] sm:$0xff]
      %v1331 = vld [vmem:[%s1325 + $0x28] sm:$0xff]
      %v1332 = vld [vmem:[%s1325 + $0x30] sm:$0xff]
      %v1333 = vld [vmem:[%s1325 + $0x38] sm:$0xff]
      %v1334 = vld [vmem:[%s1325 + $0x40] sm:$0xff]
      %v1335 = vld [vmem:[%s1325 + $0x48] sm:$0xff]
      %v1336 = vld [vmem:[%s1325 + $0x50] sm:$0xff]
      %v1337 = vld [vmem:[%s1325 + $0x58] sm:$0xff]
      %v1338 = vld [vmem:[%s1325 + $0x60] sm:$0xff]
      %v1339 = vld [vmem:[%s1325 + $0x68] sm:$0xff]
      %v1340 = vld [vmem:[%s1325 + $0x70] sm:$0xff]
      %v1341 = vld [vmem:[%s1325 + $0x78] sm:$0xff]
      %v1342 = vld [vmem:[%s1325 + $0x80] sm:$0xff]
      %v1343 = vld [vmem:[%s1325 + $0x88] sm:$0xff]
      %v1344 = vld [vmem:[%s1325 + $0x90] sm:$0xff]
      %v1345 = vld [vmem:[%s1325 + $0x98] sm:$0xff]
      %v1346 = vld [vmem:[%s1325 + $0xa0] sm:$0xff]
      %v1347 = vld [vmem:[%s1325 + $0xa8] sm:$0xff]
      %v1348 = vld [vmem:[%s1325 + $0xb0] sm:$0xff]
      %v1349 = vld [vmem:[%s1325 + $0xb8] sm:$0xff]
      %v1350 = vld [vmem:[%s1325 + $0xc0] sm:$0xff]
      %v1351 = vld [vmem:[%s1325 + $0xc8] sm:$0xff]
      %v1352 = vld [vmem:[%s1325 + $0xd0] sm:$0xff]
      %v1353 = vld [vmem:[%s1325 + $0xd8] sm:$0xff]
      %v1354 = vld [vmem:[%s1325 + $0xe0] sm:$0xff]
      %v1355 = vld [vmem:[%s1325 + $0xe8] sm:$0xff]
      %v1356 = vld [vmem:[%s1325 + $0xf0] sm:$0xff]
      %v1357 = vld [vmem:[%s1325 + $0xf8] sm:$0xff]
      %v1390 = vunpack.c.l.b16 %v1326
      %v1391 = vunpack.c.h.b16 %v1326
      %v1392 = vunpack.c.l.b16 %v1327
      %v1393 = vunpack.c.h.b16 %v1327
      %v1394 = vunpack.c.l.b16 %v1328
      %v1395 = vunpack.c.h.b16 %v1328
      %v1396 = vunpack.c.l.b16 %v1329
      %v1397 = vunpack.c.h.b16 %v1329
      %v1398 = vunpack.c.l.b16 %v1330
      %v1399 = vunpack.c.h.b16 %v1330
      %v1400 = vunpack.c.l.b16 %v1331
      %v1401 = vunpack.c.h.b16 %v1331
      %v1402 = vunpack.c.l.b16 %v1332
      %v1403 = vunpack.c.h.b16 %v1332
      %v1404 = vunpack.c.l.b16 %v1333
      %v1405 = vunpack.c.h.b16 %v1333
      %v1406 = vunpack.c.l.b16 %v1334
      %v1407 = vunpack.c.h.b16 %v1334
      %v1408 = vunpack.c.l.b16 %v1335
      %v1409 = vunpack.c.h.b16 %v1335
      %v1410 = vunpack.c.l.b16 %v1336
      %v1411 = vunpack.c.h.b16 %v1336
      %v1412 = vunpack.c.l.b16 %v1337
      %v1413 = vunpack.c.h.b16 %v1337
      %v1414 = vunpack.c.l.b16 %v1338
      %v1415 = vunpack.c.h.b16 %v1338
      %v1416 = vunpack.c.l.b16 %v1339
      %v1417 = vunpack.c.h.b16 %v1339
      %v1418 = vunpack.c.l.b16 %v1340
      %v1419 = vunpack.c.h.b16 %v1340
      %v1420 = vunpack.c.l.b16 %v1341
      %v1421 = vunpack.c.h.b16 %v1341
      %v1422 = vunpack.c.l.b16 %v1342
      %v1423 = vunpack.c.h.b16 %v1342
      %v1424 = vunpack.c.l.b16 %v1343
      %v1425 = vunpack.c.h.b16 %v1343
      %v1426 = vunpack.c.l.b16 %v1344
      %v1427 = vunpack.c.h.b16 %v1344
      %v1428 = vunpack.c.l.b16 %v1345
      %v1429 = vunpack.c.h.b16 %v1345
      %v1430 = vunpack.c.l.b16 %v1346
      %v1431 = vunpack.c.h.b16 %v1346
      %v1432 = vunpack.c.l.b16 %v1347
      %v1433 = vunpack.c.h.b16 %v1347
      %v1434 = vunpack.c.l.b16 %v1348
      %v1435 = vunpack.c.h.b16 %v1348
      %v1436 = vunpack.c.l.b16 %v1349
      %v1437 = vunpack.c.h.b16 %v1349
      %v1438 = vunpack.c.l.b16 %v1350
      %v1439 = vunpack.c.h.b16 %v1350
      %v1440 = vunpack.c.l.b16 %v1351
      %v1441 = vunpack.c.h.b16 %v1351
      %v1442 = vunpack.c.l.b16 %v1352
      %v1443 = vunpack.c.h.b16 %v1352
      %v1444 = vunpack.c.l.b16 %v1353
      %v1445 = vunpack.c.h.b16 %v1353
      %v1446 = vunpack.c.l.b16 %v1354
      %v1447 = vunpack.c.h.b16 %v1354
      %v1448 = vunpack.c.l.b16 %v1355
      %v1449 = vunpack.c.h.b16 %v1355
      %v1450 = vunpack.c.l.b16 %v1356
      %v1451 = vunpack.c.h.b16 %v1356
      %v1452 = vunpack.c.l.b16 %v1357
      %v1453 = vunpack.c.h.b16 %v1357
      %v1454 = vpack.c.b16 %v1392, %v1390
      %v1455 = vpack.c.b16 %v1393, %v1391
      %v1456 = vpack.c.b16 %v1396, %v1394
      %v1457 = vpack.c.b16 %v1397, %v1395
      %v1458 = vpack.c.b16 %v1400, %v1398
      %v1459 = vpack.c.b16 %v1401, %v1399
      %v1460 = vpack.c.b16 %v1404, %v1402
      %v1461 = vpack.c.b16 %v1405, %v1403
      %v1462 = vpack.c.b16 %v1408, %v1406
      %v1463 = vpack.c.b16 %v1409, %v1407
      %v1464 = vpack.c.b16 %v1412, %v1410
      %v1465 = vpack.c.b16 %v1413, %v1411
      %v1466 = vpack.c.b16 %v1416, %v1414
      %v1467 = vpack.c.b16 %v1417, %v1415
      %v1468 = vpack.c.b16 %v1420, %v1418
      %v1469 = vpack.c.b16 %v1421, %v1419
      %v1470 = vpack.c.b16 %v1424, %v1422
      %v1471 = vpack.c.b16 %v1425, %v1423
      %v1472 = vpack.c.b16 %v1428, %v1426
      %v1473 = vpack.c.b16 %v1429, %v1427
      %v1474 = vpack.c.b16 %v1432, %v1430
      %v1475 = vpack.c.b16 %v1433, %v1431
      %v1476 = vpack.c.b16 %v1436, %v1434
      %v1477 = vpack.c.b16 %v1437, %v1435
      %v1478 = vpack.c.b16 %v1440, %v1438
      %v1479 = vpack.c.b16 %v1441, %v1439
      %v1480 = vpack.c.b16 %v1444, %v1442
      %v1481 = vpack.c.b16 %v1445, %v1443
      %v1482 = vpack.c.b16 %v1448, %v1446
      %v1483 = vpack.c.b16 %v1449, %v1447
      %v1484 = vpack.c.b16 %v1452, %v1450
      %v1485 = vpack.c.b16 %v1453, %v1451
      %1518 = vmatpush.bf16.msra.mxu0 %v1468
      %1519 = vmatpush.bf16.msra.mxu0 %v1466
      %1520 = vmatpush.bf16.msra.mxu0 %v1464
      %1521 = vmatpush.bf16.msra.mxu0 %v1462
      %1522 = vmatpush.bf16.msra.mxu0 %v1460
      %1523 = vmatpush.bf16.msra.mxu0 %v1458
      %1524 = vmatpush.bf16.msra.mxu0 %v1456
      %1525 = vmatpush.bf16.msra.mxu0 %v1454
      %1526 = vmatmul.bf16.gmra.mxu0 %v356
      %v1527 = vpop.f32.mrf.mxu0
      %v1528 = vadd.f32 0.0, %v1527
      %v1529 = vpop.f32.mrf.mxu0
      %v1530 = vadd.f32 0.0, %v1529
      %1531 = vmatmul.bf16.gmra.mxu0 %v358
      %v1532 = vpop.f32.mrf.mxu0
      %v1533 = vadd.f32 0.0, %v1532
      %v1534 = vpop.f32.mrf.mxu0
      %1535 = vdwg.mxu0
      %1536 = vmatpush.bf16.msra.mxu0 %v1484
      %1537 = vmatpush.bf16.msra.mxu0 %v1482
      %1538 = vmatpush.bf16.msra.mxu0 %v1480
      %1539 = vmatpush.bf16.msra.mxu0 %v1478
      %1540 = vmatpush.bf16.msra.mxu0 %v1476
      %1541 = vmatpush.bf16.msra.mxu0 %v1474
      %1542 = vmatpush.bf16.msra.mxu0 %v1472
      %1543 = vmatpush.bf16.msra.mxu0 %v1470
      %1544 = vmatmul.bf16.gmra.mxu0 %v357
      %v1545 = vpop.f32.mrf.mxu0
      %v1546 = vadd.f32 %v1528, %v1545
      %v1547 = vpop.f32.mrf.mxu0
      %v1548 = vadd.f32 %v1530, %v1547
      %1549 = vmatmul.bf16.gmra.mxu0 %v359
      %v1550 = vpop.f32.mrf.mxu0
      %v1551 = vadd.f32 %v1533, %v1550
      %v1552 = vpop.f32.mrf.mxu0
      %1553 = vdwg.mxu0
      %1554 = vmatpush.bf16.msra.mxu0 %v1469
      %1555 = vmatpush.bf16.msra.mxu0 %v1467
      %1556 = vmatpush.bf16.msra.mxu0 %v1465
      %1557 = vmatpush.bf16.msra.mxu0 %v1463
      %1558 = vmatpush.bf16.msra.mxu0 %v1461
      %1559 = vmatpush.bf16.msra.mxu0 %v1459
      %1560 = vmatpush.bf16.msra.mxu0 %v1457
      %1561 = vmatpush.bf16.msra.mxu0 %v1455
      %1562 = vmatmul.bf16.gmra.mxu0 %v356
      %v1563 = vpop.f32.mrf.mxu0
      %v1564 = vadd.f32 0.0, %v1563
      %v1565 = vpop.f32.mrf.mxu0
      %v1566 = vadd.f32 0.0, %v1565
      %1567 = vmatmul.bf16.gmra.mxu0 %v358
      %v1568 = vpop.f32.mrf.mxu0
      %v1569 = vadd.f32 0.0, %v1568
      %v1570 = vpop.f32.mrf.mxu0
      %1571 = vdwg.mxu0
      %1572 = vmatpush.bf16.msra.mxu0 %v1485
      %1573 = vmatpush.bf16.msra.mxu0 %v1483
      %1574 = vmatpush.bf16.msra.mxu0 %v1481
      %1575 = vmatpush.bf16.msra.mxu0 %v1479
      %1576 = vmatpush.bf16.msra.mxu0 %v1477
      %1577 = vmatpush.bf16.msra.mxu0 %v1475
      %1578 = vmatpush.bf16.msra.mxu0 %v1473
      %1579 = vmatpush.bf16.msra.mxu0 %v1471
      %1580 = vmatmul.bf16.gmra.mxu0 %v357
      %v1581 = vpop.f32.mrf.mxu0
      %v1582 = vadd.f32 %v1564, %v1581
      %v1583 = vpop.f32.mrf.mxu0
      %v1584 = vadd.f32 %v1566, %v1583
      %1585 = vmatmul.bf16.gmra.mxu0 %v359
      %v1586 = vpop.f32.mrf.mxu0
      %v1587 = vadd.f32 %v1569, %v1586
      %v1588 = vpop.f32.mrf.mxu0
      %1589 = vdwg.mxu0
      %v1590 = vpack.c.bf16 %v1548, %v1546
      %v1591 = vpack.c.bf16 %v1584, %v1582
      %v1592 = vpack.c.bf16 %v1551, %v1551
      %v1593 = vpack.c.bf16 %v1587, %v1587
      %s1594 = scalar_lea.vmem %s1, 32
      %v1595 = vld [vmem:[%s1594] sm:$0xf]
      %v1596 = vld [vmem:[%s1594 + $0x4] sm:$0xf]
      %v1599 = vunpack.c.l.b16 %v1595
      %v1600 = vunpack.c.l.b16 %v1596
      %v1601 = vpack.c.b16 %v1600, %v1599
      %v1603 = vsel %vm608, %v1601, 0
      %v1606 = vsel %vm612, %v1592, 0
      %v1609 = vsel %vm612, %v1593, 0
      %1611 = vmatpush.bf16.msra.mxu0 0
      %1612 = vmatpush.bf16.msra.mxu0 0
      %1613 = vmatpush.bf16.msra.mxu0 0
      %1614 = vmatpush.bf16.msra.mxu0 0
      %1615 = vmatpush.bf16.msra.mxu0 0
      %1616 = vmatpush.bf16.msra.mxu0 0
      %1617 = vmatpush.bf16.msra.mxu0 %v1606
      %1618 = vmatpush.bf16.msra.mxu0 %v1590
      %1619 = vmatmul.bf16.gmra.mxu0 %v1603
      %v1620 = vpop.f32.mrf.mxu0
      %v1621 = vadd.f32 0.0, %v1620
      %v1622 = vpop.f32.mrf.mxu0
      %v1623 = vadd.f32 0.0, %v1622
      %1624 = vdwg.mxu0
      %1625 = vmatpush.bf16.msra.mxu0 0
      %1626 = vmatpush.bf16.msra.mxu0 0
      %1627 = vmatpush.bf16.msra.mxu0 0
      %1628 = vmatpush.bf16.msra.mxu0 0
      %1629 = vmatpush.bf16.msra.mxu0 0
      %1630 = vmatpush.bf16.msra.mxu0 0
      %1631 = vmatpush.bf16.msra.mxu0 %v1609
      %1632 = vmatpush.bf16.msra.mxu0 %v1591
      %1633 = vmatmul.bf16.gmra.mxu0 %v1603
      %v1634 = vpop.f32.mrf.mxu0
      %v1635 = vadd.f32 0.0, %v1634
      %v1636 = vpop.f32.mrf.mxu0
      %v1637 = vadd.f32 0.0, %v1636
      %1638 = vdwg.mxu0
      %v1639 = vadd.f32 %v1321, %v1621
      %v1640 = vadd.f32 %v1322, %v1635
      %v1641 = vadd.f32 %v1323, %v1623
      %v1642 = vadd.f32 %v1324, %v1637
      %v1643 = vld [vmem:[%s3] sm:$0xff]
      %v1644 = vld [vmem:[%s3 + $0x8] sm:$0xff]
      %1646 = vset.pattern.permute.xlu0 0
      %1647 = vperm.xlu0 %1646, %v1643
      %v1648 = vpop.permute.xlu0 %1647
      %1651 = vset.pattern.permute.xlu0 0
      %1652 = vperm.xlu0 %1651, %v1644
      %v1653 = vpop.permute.xlu0 %1652
      %v1655 = vadd.f32 %v1639, %v1648
      %v1656 = vadd.f32 %v1640, %v1648
      %v1657 = vadd.f32 %v1641, %v1653
      %v1658 = vadd.f32 %v1642, %v1653
      %1659 = vst [vmem:[%s300] sm:$0xff] %v1655
      %1660 = vst [vmem:[%s300 + $0x8] sm:$0xff] %v1656
      %1661 = vst [vmem:[%s300 + $0x10] sm:$0xff] %v1657
      %1662 = vst [vmem:[%s300 + $0x18] sm:$0xff] %v1658
      %v1663 = vlaneseq
      %v1664 = vand.u32 %v1663, 127
      %v1665 = vadd.s32 %v1664, 128
      %vm1666 = vcmp.lt.s32.totalorder %v1664, 0
      %v1667 = vsub.s32 0, %v1664
      %v1668 = vsel %vm1666, %v1667, %v1664
      %v1669 = vshrl.u32 %v1668, 5
      %v1670 = vand.u32 %v1668, 31
      %v1671 = vsub.s32 0, %v1670
      %v1672 = vsel %vm1666, %v1671, %v1670
      %vm1673 = vcmp.lt.s32.totalorder %v1665, 0
      %v1674 = vsub.s32 0, %v1665
      %v1675 = vsel %vm1673, %v1674, %v1665
      %v1676 = vshrl.u32 %v1675, 5
      %v1677 = vand.u32 %v1675, 31
      %v1678 = vsub.s32 0, %v1677
      %v1679 = vsel %vm1673, %v1678, %v1677
      %vm1680 = vcmp.ne.s32.totalorder %v1672, 0
      %vm1681 = vcmp.ne.s32.totalorder %v1679, 0
      %vm1682 = vcmp.lt.s32.totalorder %v1672, 0
      %vm1683 = vcmp.lt.s32.totalorder %v1679, 0
      %vm1684 = vmand %vm1682, %vm1680
      %vm1685 = vmand %vm1683, %vm1681
      %v1686 = vadd.s32 %v1672, 32
      %v1687 = vadd.s32 %v1679, 32
      %v1688 = vsel %vm1684, %v1686, %v1672
      %v1689 = vsel %vm1685, %v1687, %v1679
      %vm1690 = vcmp.lt.s32.totalorder %v1688, 16
      %vm1691 = vcmp.lt.s32.totalorder %v1689, 16
      %v1692 = vsel %vm1690, 1, 0
      %v1693 = vsel %vm1691, 1, 0
      %vm1694 = vcmp.eq.s32.totalorder %v1692, 1
      %vm1695 = vcmp.eq.s32.totalorder %v1693, 1
      %v1696 = vsel %vm1694, %v1639, 0.0
      %v1697 = vsel %vm1695, %v1640, 0.0
      %p1698 = scmp.eq.s32.totalorder %s23, 0
      // Predicated region
      $region37: #{conv_block_forward.2} parent=35 // pred_check
        %p1699 = pneg %p1698
      $region38: #{conv_block_forward.2} parent=35 // pred_check_branch
        %1701 = sbr.rel (%p1699) target = $region40
      $region39: #{conv_block_forward.2} parent=35 // pred_region
        %vm1702 = vcmask 7168
        %1703 = vst.msk [vmem:[%s304] sm:$0xff] %vm1702, 0.0
        %1704 = vst.msk [vmem:[%s308] sm:$0xff] %vm1702, 0.0
      $region40: #{conv_block_forward.2} parent=35 // pred_fallthru
        _
      %v1705 = vld [vmem:[%s304] sm:$0xff]
      %v1706 = vadd.f32 %v1696, %v1697
      %1707 = vadd.xlane.f32.xlu0 %v1706
      %v1708 = vpop.xlane.xlu0 %1707
      %v1709 = vadd.f32 %v1705, %v1708
      %vm1710 = vcmask 7168
      %1711 = vst.msk [vmem:[%s304] sm:$0xff] %vm1710, %v1709
      %v1712 = vld [vmem:[%s308] sm:$0xff]
      %v1713 = vmul.f32 %v1696, %v1696
      %v1714 = vmul.f32 %v1697, %v1697
      %v1715 = vadd.f32 %v1713, %v1714
      %1716 = vadd.xlane.f32.xlu0 %v1715
      %v1717 = vpop.xlane.xlu0 %1716
      %v1718 = vadd.f32 %v1712, %v1717
      %1719 = vst.msk [vmem:[%s308] sm:$0xff] %vm1710, %v1718
      %p1720 = scmp.lt.s32.totalorder %s22, 1
      %s1721 = scalar_select %p1720, %s22, 1
      %p1722 = scmp.lt.s32.totalorder %s23, 0
      %s1723 = scalar_select %p1722, %s23, 0
      %s1724 = smul.addr %s1723, 4
      %s1725 = smul.addr %s1721, 4
      %s1726 = sadd.s32 %s1724, %s1725
      %s1727 = smul.addr %s1726, 8
      %s1728 = scalar_lea.vmem %s4, %s1727
      %p1729 = scmp.lt.s32.totalorder %s22, 1
      %s1730 = scalar_select %p1729, %s22, 1
      %s1731 = smul.addr %s1730, 8
      %s1732 = scalar_lea.vmem %s5, %s1731
      %p1733 = scmp.lt.s32.totalorder %s22, 1
      %s1734 = scalar_select %p1733, %s22, 1
      %s1735 = smul.addr %s1734, 8
      %s1736 = scalar_lea.vmem %s6, %s1735
      // Predicated region
      $region41: #{conv_block_forward.2} parent=35 // pred_check
        %p1737 = pneg %p141
      $region42: #{conv_block_forward.2} parent=35 // pred_check_branch
        %1739 = sbr.rel (%p1737) target = $region44
      $region43: #{conv_block_forward.2} parent=35 // pred_region
        _
      $region44: #{conv_block_forward.2} parent=35 // pred_fallthru
        _
      // Predicated region
      $region45: #{conv_block_forward.2} parent=35 // pred_check
        %p1740 = pneg %p167
      $region46: #{conv_block_forward.2} parent=35 // pred_check_branch
        %1742 = sbr.rel (%p1740) target = $region48
      $region47: #{conv_block_forward.2} parent=35 // pred_region
        _
      $region48: #{conv_block_forward.2} parent=35 // pred_fallthru
        _
      // Predicated region
      $region49: #{conv_block_forward.2} parent=35 // pred_check
        %p1743 = pneg %p193
      $region50: #{conv_block_forward.2} parent=35 // pred_check_branch
        %1745 = sbr.rel (%p1743) target = $region52
      $region51: #{conv_block_forward.2} parent=35 // pred_region
        _
      $region52: #{conv_block_forward.2} parent=35 // pred_fallthru
        _
    $region36: #{conv_block_forward.2} parent=5 // pred_fallthru
      _
    %p1746 = scmp.le.s32.totalorder 2, %s13
    // Predicated region
    $region53: #{conv_block_forward.2} parent=5 // pred_check
      %p1747 = pneg %p1746
    $region54: #{conv_block_forward.2} parent=5 // pred_check_branch
      %1749 = sbr.rel (%p1747) target = $region56
    $region55: #{conv_block_forward.2} parent=5 // pred_region
      %s1750 = ssub.s32 %s13, 2
      // Predicated region
      $region57: #{conv_block_forward.2} parent=55 // pred_check
        %p1751 = pneg %p147
      $region58: #{conv_block_forward.2} parent=55 // pred_check_branch
        %1753 = sbr.rel (%p1751) target = $region60
      $region59: #{conv_block_forward.2} parent=55 // pred_region
        %p1754 = scmp.lt.s32.totalorder %s24, 1
        %s1755 = scalar_select %p1754, %s24, 1
        %p1756 = scmp.lt.s32.totalorder %s25, 0
        %s1757 = scalar_select %p1756, %s25, 0
        %s1758 = smul.addr %s1757, 4
        %s1759 = smul.addr %s1755, 4
        %s1760 = sadd.s32 %s1758, %s1759
        %s1761 = smul.addr %s1760, 8
        %s1762 = scalar_lea.vmem %s4, %s1761
      $region60: #{conv_block_forward.2} parent=55 // pred_fallthru
        _
      // Predicated region
      $region61: #{conv_block_forward.2} parent=55 // pred_check
        %p1763 = pneg %p173
      $region62: #{conv_block_forward.2} parent=55 // pred_check_branch
        %1765 = sbr.rel (%p1763) target = $region64
      $region63: #{conv_block_forward.2} parent=55 // pred_region
        %p1766 = scmp.lt.s32.totalorder %s24, 1
        %s1767 = scalar_select %p1766, %s24, 1
        %s1768 = smul.addr %s1767, 8
        %s1769 = scalar_lea.vmem %s5, %s1768
      $region64: #{conv_block_forward.2} parent=55 // pred_fallthru
        _
      // Predicated region
      $region65: #{conv_block_forward.2} parent=55 // pred_check
        %p1770 = pneg %p199
      $region66: #{conv_block_forward.2} parent=55 // pred_check_branch
        %1772 = sbr.rel (%p1770) target = $region68
      $region67: #{conv_block_forward.2} parent=55 // pred_region
        %p1773 = scmp.lt.s32.totalorder %s24, 1
        %s1774 = scalar_select %p1773, %s24, 1
        %s1775 = smul.addr %s1774, 8
        %s1776 = scalar_lea.vmem %s6, %s1775
      $region68: #{conv_block_forward.2} parent=55 // pred_fallthru
        _
    $region56: #{conv_block_forward.2} parent=5 // pred_fallthru
      _
  $region6: #{conv_block_forward.2} parent=0 // loop_footer
    %s17 = sadd.s32 1, %s13
  $region7: #{conv_block_forward.2} parent=0 // loop_footer_branch
    %12 = sbr.rel target = $region3
  $region8: #{conv_block_forward.2} parent=0 // loop_exit
    _

</llo_original>
